<compile_context>
chip_gen: v5e
topology: v5e:2x2
jax: 0.10.0
libtpu: 0.0.40
codegen_flags: <defaults>
</compile_context>

<pallas_src>
import functools

import jax
import jax.numpy as jnp
import numpy as np
from jax.experimental import pallas as pl
from jax.experimental.pallas import tpu as pltpu

EPS = 1e-5
# 2*Cout must fit one MXU column pass to keep the 1x1 shortcut fused into the
# conv1 weights; 128 is safe on every generation (v5e 128-wide, v6e/v7x 256).
_FUSE_SHORTCUT_MAX_COLS = 128


# ----------------------------------------------------------------------------
# In-kernel helper (traced Python, not a separate kernel)
# ----------------------------------------------------------------------------
def _conv3x3_im2col(v, W):
    """im2col for a 3x3 'same' conv on flattened spatial maps.

    v : (Nb, H*W, C) bf16 feature maps (spatial flattened row-major).
    Returns (Nb*H*W, 9*C) bf16 where column block (dy*3+dx)*C:(dy*3+dx+1)*C
    holds the input at spatial offset (dy-1, dx-1) — matching a row-major
    reshape of an HWIO (3, 3, C, Ncols) weight to (9*C, Ncols).

    Padding is synthesised without pad/scatter ops:
      - 2 zero rows are concatenated above/below each sample along the
        (untiled) flat-row axis,
      - tap (dy, dx) is a static sublane-offset slice of that padded matrix,
      - W-boundary wrap-around source columns are zeroed with an iota mask
        (masking is done once per dx on the bf16 copy and reused by 3 taps).
    """
    Nb, S, C = v.shape
    z = jnp.zeros((Nb, 2 * W, C), v.dtype)
    vf = jnp.concatenate([z, v, z], axis=1)                    # (Nb, S+4W, C)
    rowmod = jax.lax.broadcasted_iota(jnp.int32, vf.shape, 1) % W
    zero = jnp.zeros((), v.dtype)
    v_by_dx = (
        jnp.where(rowmod != W - 1, vf, zero),   # dx = 0 reads col w-1: col W-1 never valid
        vf,                                     # dx = 1
        jnp.where(rowmod != 0, vf, zero),       # dx = 2 reads col w+1: col 0 never valid
    )
    cols = []
    for dy in range(3):
        for dx in range(3):
            s = (dy + 1) * W + (dx - 1)         # static flat-row offset of this tap
            cols.append(v_by_dx[dx][:, s:s + S, :])
    return jnp.concatenate(cols, axis=-1).reshape(Nb * S, 9 * C)


# ----------------------------------------------------------------------------
# Fused kernel: conv1+BN1+ReLU, conv2+BN2, 1x1 shortcut+BN, SE, add+ReLU
# ----------------------------------------------------------------------------
def residual_block_kernel(x_ref, w1_ref, b1_ref, wsc_ref, w2_ref, b2_ref,
                          se1_ref, se2_ref, o_ref, *, W, fuse_sc):
    """Nb batch samples per grid step.

    x_ref  : (Nb, H*W, Cin)          bf16 input (NHWC, spatial flattened)
    w1_ref : (9*Cin, Ncols)          bf16; cols[:Cout] = conv1_w * bn1_scale,
                                     and (if fuse_sc) cols[Cout:] = 1x1
                                     shortcut * sc_scale on the centre tap only
    b1_ref : (1, 2*Cout)             f32  [bn1_shift | sc_shift]
    wsc_ref: (Cin, Cout)             bf16 shortcut weights (used when not fused)
    w2_ref : (9*Cout, Cout)          bf16 conv2_w * bn2_scale
    b2_ref : (1, Cout)               f32  bn2_shift
    se1_ref: (Cout, Chid) f32,  se2_ref: (Chid, Cout) f32
    o_ref  : (Nb, H*W, Cout)         f32
    """
    Nb, S, Cin = x_ref.shape
    Cout = o_ref.shape[-1]

    # conv1 + BN1 (+ optionally fused 1x1 shortcut + BN): one K=9*Cin MXU pass.
    im1 = _conv3x3_im2col(x_ref[...], W)                     # (M, 9*Cin) bf16
    acc1 = jnp.dot(im1, w1_ref[...], preferred_element_type=jnp.float32)
    b1 = b1_ref[...]                                         # (1, 2*Cout) f32
    y1 = jnp.maximum(acc1[:, :Cout] + b1[:, :Cout], 0.0)     # relu(bn1(conv1(x)))
    if fuse_sc:
        sc = acc1[:, Cout:] + b1[:, Cout:]                   # bn_sc(conv1x1(x))
    else:
        # Centre-tap columns of the im2col matrix are exactly x: one small dot.
        sc = jnp.dot(im1[:, 4 * Cin:5 * Cin], wsc_ref[...],
                     preferred_element_type=jnp.float32) + b1[:, Cout:]

    # conv2 + BN2 : single bf16 cast of y1, one K=9*Cout MXU pass.
    y1b = y1.astype(jnp.bfloat16).reshape(Nb, S, Cout)
    im2 = _conv3x3_im2col(y1b, W)                            # (M, 9*Cout) bf16
    y2 = jnp.dot(im2, w2_ref[...],
                 preferred_element_type=jnp.float32) + b2_ref[...]   # (M, Cout)

    # Squeeze-and-Excitation, batched across the Nb samples of this step:
    # GAP -> FC -> ReLU -> FC -> sigmoid.
    y2s = y2.reshape(Nb, S, Cout)
    pooled = jnp.mean(y2s, axis=1)                           # (Nb, Cout)
    hid = jnp.maximum(jnp.dot(pooled, se1_ref[...],
                              preferred_element_type=jnp.float32), 0.0)
    gate = jax.nn.sigmoid(jnp.dot(hid, se2_ref[...],
                                  preferred_element_type=jnp.float32))  # (Nb, Cout)

    # SE gating + residual add + ReLU (Dropout2d = identity at inference).
    out = jnp.maximum(y2s * gate[:, None, :] + sc.reshape(Nb, S, Cout), 0.0)
    o_ref[...] = out.astype(o_ref.dtype)


# ----------------------------------------------------------------------------
# Wrapper helpers
# ----------------------------------------------------------------------------
def _pick_block_batch(N, S):
    """Samples per grid step: aim for >=128 matmul rows per step (amortize the
    ~0.35us/step overhead and fill the MXU M dim), keep >=2 grid steps when the
    batch allows both (so v7x's 2 TensorCores both get work), and cap the rows
    per step so the per-step working set stays VMEM-friendly at large H*W."""
    best = 1
    for nb in range(1, N + 1):
        if N % nb:
            continue
        if nb > 1 and nb * S > 4096:
            break
        best = nb
        if nb * S >= 128 and (N // nb) >= 2:
            break
    return best


def _vmem_limit_bytes(Nb, H, W, Cin, Cout, Ncols):
    """Rough per-step working-set estimate -> explicit scoped-VMEM limit."""
    S = H * W
    pad = (H + 4) * W
    live = (3 * Nb * pad * Cin * 2 + Nb * S * 9 * Cin * 2        # conv1 im2col (bf16)
            + 3 * Nb * pad * Cout * 2 + Nb * S * 9 * Cout * 2    # conv2 im2col (bf16)
            + Nb * S * (Ncols + 4 * Cout) * 4                    # f32 temporaries
            + 2 * (2 * Nb * S * Cin) + 2 * (4 * Nb * S * Cout))  # double-buffered I/O
    return int(min(100 * 2**20, max(32 * 2**20, 2 * live)))


def residual_block_forward_nhwc(x_nhwc, params):
    """Full ResidualBlock forward (stride=1, in_channels != out_channels),
    NHWC in / NHWC out (use this entry point to avoid layout transposes when
    the surrounding model is kept NHWC across blocks)."""
    N, H, W, Cin = x_nhwc.shape
    Cout = params["conv1_w"].shape[-1]
    Chid = params["se_w1"].shape[-1]
    S = H * W
    # Relayout-free flat padding / reshapes need W % 8 == 0 (perf, not math).
    assert W % 8 == 0, "kernel expects W to be a multiple of 8"

    Nb = _pick_block_batch(N, S)
    fuse_sc = (2 * Cout) <= _FUSE_SHORTCUT_MAX_COLS

    # Trace-time prep on tiny weight tensors (constant-folds under jit):
    # fold BN scales into conv weights, optionally append the 1x1 shortcut as
    # extra output columns on the centre tap, reshape for im2col, cast to bf16.
    w1f = params["conv1_w"] * params["bn1_scale"]                  # (3,3,Cin,Cout)
    scf = params["sc_w"] * params["sc_scale"]                      # (Cin,Cout)
    if fuse_sc:
        sc_cols = jnp.zeros((3, 3, Cin, Cout), jnp.float32).at[1, 1].set(scf)
        w1c = jnp.concatenate([w1f, sc_cols], axis=-1)             # (3,3,Cin,2*Cout)
    else:
        w1c = w1f
    w1c = w1c.reshape(9 * Cin, -1).astype(jnp.bfloat16)
    Ncols = w1c.shape[-1]
    wsc = scf.astype(jnp.bfloat16)                                 # used iff not fused
    b1c = jnp.concatenate([params["bn1_shift"],
                           params["sc_shift"]])[None, :].astype(jnp.float32)
    w2c = (params["conv2_w"] * params["bn2_scale"]).reshape(
        9 * Cout, Cout).astype(jnp.bfloat16)
    b2c = params["bn2_shift"][None, :].astype(jnp.float32)

    # Single bf16 cast of the activations, spatial flattened (free reshape).
    x_flat = x_nhwc.reshape(N, S, Cin).astype(jnp.bfloat16)

    kern = functools.partial(residual_block_kernel, W=W, fuse_sc=fuse_sc)
    out_flat = pl.pallas_call(
        kern,
        out_shape=jax.ShapeDtypeStruct((N, S, Cout), jnp.float32),
        grid=(N // Nb,),
        in_specs=[
            pl.BlockSpec((Nb, S, Cin), lambda n: (n, 0, 0)),
            pl.BlockSpec((9 * Cin, Ncols), lambda n: (0, 0)),
            pl.BlockSpec((1, 2 * Cout), lambda n: (0, 0)),
            pl.BlockSpec((Cin, Cout), lambda n: (0, 0)),
            pl.BlockSpec((9 * Cout, Cout), lambda n: (0, 0)),
            pl.BlockSpec((1, Cout), lambda n: (0, 0)),
            pl.BlockSpec((Cout, Chid), lambda n: (0, 0)),
            pl.BlockSpec((Chid, Cout), lambda n: (0, 0)),
        ],
        out_specs=pl.BlockSpec((Nb, S, Cout), lambda n: (n, 0, 0)),
        compiler_params=pltpu.CompilerParams(
            dimension_semantics=("parallel",),        # batch steps shard over TCs
            vmem_limit_bytes=_vmem_limit_bytes(Nb, H, W, Cin, Cout, Ncols)),
    )(x_flat, w1c, b1c, wsc, w2c, b2c, params["se_w1"], params["se_w2"])
    return out_flat.reshape(N, H, W, Cout)


def residual_block_forward(x_nchw, params):
    """NCHW interface matching the PyTorch module.  In a real model keep the
    activations NHWC across blocks and call residual_block_forward_nhwc to
    avoid these two whole-tensor HBM transposes."""
    x_nhwc = jnp.transpose(x_nchw, (0, 2, 3, 1))
    out = residual_block_forward_nhwc(x_nhwc, params)
    return jnp.transpose(out, (0, 3, 1, 2))


# ----------------------------------------------------------------------------
# Pure-JAX reference (for correctness check)
# ----------------------------------------------------------------------------
def ref_forward(x_nchw, params):
    def conv(x, w_hwio, pad):
        w = jnp.transpose(w_hwio, (3, 2, 0, 1))          # HWIO -> OIHW
        return jax.lax.conv_general_dilated(
            x, w, (1, 1), [(pad, pad), (pad, pad)],
            dimension_numbers=("NCHW", "OIHW", "NCHW"))

    def bn(x, scale, shift):
        return x * scale.reshape(1, -1, 1, 1) + shift.reshape(1, -1, 1, 1)

    out = jax.nn.relu(bn(conv(x_nchw, params["conv1_w"], 1),
                         params["bn1_scale"], params["bn1_shift"]))
    out = bn(conv(out, params["conv2_w"], 1),
             params["bn2_scale"], params["bn2_shift"])
    pooled = jnp.mean(out, axis=(2, 3))
    s = jax.nn.sigmoid(jnp.maximum(pooled @ params["se_w1"], 0.0)
                       @ params["se_w2"])
    out = out * s[:, :, None, None]
    sc_w = params["sc_w"].reshape(1, 1, *params["sc_w"].shape)
    sc = bn(conv(x_nchw, sc_w, 0), params["sc_scale"], params["sc_shift"])
    return jax.nn.relu(out + sc)


# ----------------------------------------------------------------------------
# Deterministic synthetic parameters + run
# ----------------------------------------------------------------------------
def make_params(key, cin, cout, reduction=16):
    ks = jax.random.split(key, 8)

    def bn_params(k, c):
        k1, k2, k3, k4 = jax.random.split(k, 4)
        gamma = 1.0 + 0.1 * jax.random.normal(k1, (c,))
        beta = 0.1 * jax.random.normal(k2, (c,))
        mean = 0.1 * jax.random.normal(k3, (c,))
        var = 1.0 + 0.1 * jax.random.uniform(k4, (c,))
        scale = gamma / jnp.sqrt(var + EPS)
        shift = beta - mean * scale
        return scale.astype(jnp.float32), shift.astype(jnp.float32)

    bn1_s, bn1_b = bn_params(ks[1], cout)
    bn2_s, bn2_b = bn_params(ks[3], cout)
    sc_s, sc_b = bn_params(ks[5], cout)
    hidden = cout // reduction
    return {
        "conv1_w": 0.1 * jax.random.normal(ks[0], (3, 3, cin, cout), jnp.float32),
        "bn1_scale": bn1_s, "bn1_shift": bn1_b,
        "conv2_w": 0.1 * jax.random.normal(ks[2], (3, 3, cout, cout), jnp.float32),
        "bn2_scale": bn2_s, "bn2_shift": bn2_b,
        "sc_w": 0.1 * jax.random.normal(ks[4], (cin, cout), jnp.float32),
        "sc_scale": sc_s, "sc_shift": sc_b,
        "se_w1": 0.3 * jax.random.normal(ks[6], (cout, hidden), jnp.float32),
        "se_w2": 0.3 * jax.random.normal(ks[7], (hidden, cout), jnp.float32),
    }


if __name__ == "__main__":
    N, Cin, Cout, H, W = 2, 16, 32, 8, 8
    key = jax.random.PRNGKey(0)
    pkey, xkey = jax.random.split(key)
    params = make_params(pkey, Cin, Cout)
    x = jax.random.normal(xkey, (N, Cin, H, W), jnp.float32)   # NCHW like torch

    fwd = jax.jit(residual_block_forward)
    out = jax.block_until_ready(fwd(x, params))

    ref = jax.block_until_ready(ref_forward(x, params))
    assert out.shape == (N, Cout, H, W), out.shape
    err = float(jnp.max(jnp.abs(out - ref)))
    # bf16 matmuls with f32 accumulation: expected max abs error ~1e-2.
    assert np.isfinite(err) and err < 6e-2, f"mismatch vs reference: {err}"

    print("KERNEL_OK")
</pallas_src>

<mosaic_0001>
module attributes {stable_mosaic.version = 11 : i64} {
  func.func @residual_block_kernel(%arg0: i32, %arg1: memref<2x64x16xbf16, #tpu.memory_space<vmem>>, %arg2: memref<144x64xbf16, #tpu.memory_space<vmem>>, %arg3: memref<1x64xf32, #tpu.memory_space<vmem>>, %arg4: memref<16x32xbf16, #tpu.memory_space<vmem>>, %arg5: memref<288x32xbf16, #tpu.memory_space<vmem>>, %arg6: memref<1x32xf32, #tpu.memory_space<vmem>>, %arg7: memref<32x2xf32, #tpu.memory_space<vmem>>, %arg8: memref<2x32xf32, #tpu.memory_space<vmem>>, %arg9: memref<2x64x32xf32, #tpu.memory_space<vmem>>) attributes {dimension_semantics = [#tpu.dimension_semantics<parallel>], iteration_bounds = array<i64: 1>, scalar_prefetch = 0 : i64, scratch_operands = 0 : i64, tpu.core_type = #tpu.core_type<tc>, window_params = [{transform_indices = @transform_0, window_bounds = array<i64: 2, 64, 16>}, {pipeline_mode = #tpu.pipeline_mode<synchronous>, transform_indices = @transform_1, window_bounds = array<i64: 144, 64>}, {pipeline_mode = #tpu.pipeline_mode<synchronous>, transform_indices = @transform_2, window_bounds = array<i64: 1, 64>}, {pipeline_mode = #tpu.pipeline_mode<synchronous>, transform_indices = @transform_3, window_bounds = array<i64: 16, 32>}, {pipeline_mode = #tpu.pipeline_mode<synchronous>, transform_indices = @transform_4, window_bounds = array<i64: 288, 32>}, {pipeline_mode = #tpu.pipeline_mode<synchronous>, transform_indices = @transform_5, window_bounds = array<i64: 1, 32>}, {pipeline_mode = #tpu.pipeline_mode<synchronous>, transform_indices = @transform_6, window_bounds = array<i64: 32, 2>}, {pipeline_mode = #tpu.pipeline_mode<synchronous>, transform_indices = @transform_7, window_bounds = array<i64: 2, 32>}, {transform_indices = @transform_8, window_bounds = array<i64: 2, 64, 32>}]} {
    %c0 = arith.constant 0 : index
    %c0_0 = arith.constant 0 : index
    %c0_1 = arith.constant 0 : index
    %0 = vector.load %arg1[%c0, %c0_0, %c0_1] : memref<2x64x16xbf16, #tpu.memory_space<vmem>>, vector<2x64x16xbf16>
    %cst = arith.constant 0.000000e+00 : bf16
    %1 = vector.broadcast %cst : bf16 to vector<2x16x16xbf16>
    %2 = tpu.concatenate %1, %0, %1 in 1 : vector<2x16x16xbf16>, vector<2x64x16xbf16>, vector<2x16x16xbf16> -> vector<2x96x16xbf16>
    %3 = tpu.iota {dimensions = array<i32: 1>} : vector<2x96x16xi32>
    %c8_i32 = arith.constant 8 : i32
    %c0_i32 = arith.constant 0 : i32
    %4 = arith.cmpi eq, %c8_i32, %c0_i32 : i32
    %c1_i32 = arith.constant 1 : i32
    %5 = arith.select %4, %c1_i32, %c8_i32 : i32
    %6 = vector.broadcast %5 : i32 to vector<2x96x16xi32>
    %7 = arith.remsi %3, %6 : vector<2x96x16xi32>
    %c0_i32_2 = arith.constant 0 : i32
    %8 = vector.broadcast %c0_i32_2 : i32 to vector<2x96x16xi32>
    %9 = arith.cmpi ne, %7, %8 : vector<2x96x16xi32>
    %c0_i32_3 = arith.constant 0 : i32
    %10 = vector.broadcast %c0_i32_3 : i32 to vector<2x96x16xi32>
    %11 = arith.cmpi slt, %7, %10 : vector<2x96x16xi32>
    %c0_i32_4 = arith.constant 0 : i32
    %12 = arith.cmpi slt, %5, %c0_i32_4 : i32
    %13 = vector.broadcast %12 : i1 to vector<2x96x16xi1>
    %14 = vector.broadcast %13 : vector<2x96x16xi1> to vector<2x96x16xi1>
    %15 = arith.xori %11, %14 : vector<2x96x16xi1>
    %16 = arith.andi %15, %9 : vector<2x96x16xi1>
    %17 = vector.broadcast %5 : i32 to vector<2x96x16xi32>
    %18 = arith.addi %7, %17 : vector<2x96x16xi32>
    %19 = arith.select %16, %18, %7 : vector<2x96x16xi1>, vector<2x96x16xi32>
    %c7_i32 = arith.constant 7 : i32
    %20 = vector.broadcast %c7_i32 : i32 to vector<2x96x16xi32>
    %21 = arith.cmpi ne, %19, %20 : vector<2x96x16xi32>
    %cst_5 = arith.constant 0.000000e+00 : bf16
    %22 = vector.broadcast %cst_5 : bf16 to vector<2x96x16xbf16>
    %23 = arith.select %21, %2, %22 : vector<2x96x16xi1>, vector<2x96x16xbf16>
    %c0_i32_6 = arith.constant 0 : i32
    %24 = vector.broadcast %c0_i32_6 : i32 to vector<2x96x16xi32>
    %25 = arith.cmpi ne, %19, %24 : vector<2x96x16xi32>
    %cst_7 = arith.constant 0.000000e+00 : bf16
    %26 = vector.broadcast %cst_7 : bf16 to vector<2x96x16xbf16>
    %27 = arith.select %25, %2, %26 : vector<2x96x16xi1>, vector<2x96x16xbf16>
    %28 = vector.extract_strided_slice %23 {offsets = [0, 7, 0], sizes = [2, 64, 16], strides = [1, 1, 1]} : vector<2x96x16xbf16> to vector<2x64x16xbf16>
    %29 = vector.extract_strided_slice %2 {offsets = [0, 8, 0], sizes = [2, 64, 16], strides = [1, 1, 1]} : vector<2x96x16xbf16> to vector<2x64x16xbf16>
    %30 = vector.extract_strided_slice %27 {offsets = [0, 9, 0], sizes = [2, 64, 16], strides = [1, 1, 1]} : vector<2x96x16xbf16> to vector<2x64x16xbf16>
    %31 = vector.extract_strided_slice %23 {offsets = [0, 15, 0], sizes = [2, 64, 16], strides = [1, 1, 1]} : vector<2x96x16xbf16> to vector<2x64x16xbf16>
    %32 = vector.extract_strided_slice %2 {offsets = [0, 16, 0], sizes = [2, 64, 16], strides = [1, 1, 1]} : vector<2x96x16xbf16> to vector<2x64x16xbf16>
    %33 = vector.extract_strided_slice %27 {offsets = [0, 17, 0], sizes = [2, 64, 16], strides = [1, 1, 1]} : vector<2x96x16xbf16> to vector<2x64x16xbf16>
    %34 = vector.extract_strided_slice %23 {offsets = [0, 23, 0], sizes = [2, 64, 16], strides = [1, 1, 1]} : vector<2x96x16xbf16> to vector<2x64x16xbf16>
    %35 = vector.extract_strided_slice %2 {offsets = [0, 24, 0], sizes = [2, 64, 16], strides = [1, 1, 1]} : vector<2x96x16xbf16> to vector<2x64x16xbf16>
    %36 = vector.extract_strided_slice %27 {offsets = [0, 25, 0], sizes = [2, 64, 16], strides = [1, 1, 1]} : vector<2x96x16xbf16> to vector<2x64x16xbf16>
    %37 = tpu.concatenate %28, %29, %30, %31, %32, %33, %34, %35, %36 in 2 : vector<2x64x16xbf16>, vector<2x64x16xbf16>, vector<2x64x16xbf16>, vector<2x64x16xbf16>, vector<2x64x16xbf16>, vector<2x64x16xbf16>, vector<2x64x16xbf16>, vector<2x64x16xbf16>, vector<2x64x16xbf16> -> vector<2x64x144xbf16>
    %38 = vector.shape_cast %37 : vector<2x64x144xbf16> to vector<128x144xbf16>
    %c0_8 = arith.constant 0 : index
    %c0_9 = arith.constant 0 : index
    %39 = vector.load %arg2[%c0_8, %c0_9] : memref<144x64xbf16, #tpu.memory_space<vmem>>, vector<144x64xbf16>
    %cst_10 = arith.constant dense<0.000000e+00> : vector<128x64xf32>
    %40 = tpu.matmul %38, %39, %cst_10 {dimension_numbers = #tpu.dot_dimension_numbers<[1], [0], [0], [1], [0, 0, 1, 1], [], []>} : vector<128x144xbf16>, vector<144x64xbf16>, vector<128x64xf32> -> vector<128x64xf32>
    %c0_11 = arith.constant 0 : index
    %c0_12 = arith.constant 0 : index
    %41 = vector.load %arg3[%c0_11, %c0_12] : memref<1x64xf32, #tpu.memory_space<vmem>>, vector<1x64xf32>
    %42 = vector.extract_strided_slice %40 {offsets = [0, 0], sizes = [128, 32], strides = [1, 1]} : vector<128x64xf32> to vector<128x32xf32>
    %43 = vector.extract_strided_slice %41 {offsets = [0, 0], sizes = [1, 32], strides = [1, 1]} : vector<1x64xf32> to vector<1x32xf32>
    %44 = vector.broadcast %43 : vector<1x32xf32> to vector<128x32xf32>
    %45 = arith.addf %42, %44 : vector<128x32xf32>
    %cst_13 = arith.constant 0.000000e+00 : f32
    %46 = vector.broadcast %cst_13 : f32 to vector<128x32xf32>
    %47 = arith.maximumf %45, %46 : vector<128x32xf32>
    %48 = vector.extract_strided_slice %40 {offsets = [0, 32], sizes = [128, 32], strides = [1, 1]} : vector<128x64xf32> to vector<128x32xf32>
    %49 = vector.extract_strided_slice %41 {offsets = [0, 32], sizes = [1, 32], strides = [1, 1]} : vector<1x64xf32> to vector<1x32xf32>
    %50 = vector.broadcast %49 : vector<1x32xf32> to vector<128x32xf32>
    %51 = arith.addf %48, %50 : vector<128x32xf32>
    %52 = arith.truncf %47 : vector<128x32xf32> to vector<128x32xbf16>
    %53 = vector.shape_cast %52 : vector<128x32xbf16> to vector<2x64x32xbf16>
    %cst_14 = arith.constant 0.000000e+00 : bf16
    %54 = vector.broadcast %cst_14 : bf16 to vector<2x16x32xbf16>
    %55 = tpu.concatenate %54, %53, %54 in 1 : vector<2x16x32xbf16>, vector<2x64x32xbf16>, vector<2x16x32xbf16> -> vector<2x96x32xbf16>
    %56 = tpu.iota {dimensions = array<i32: 1>} : vector<2x96x32xi32>
    %c8_i32_15 = arith.constant 8 : i32
    %c0_i32_16 = arith.constant 0 : i32
    %57 = arith.cmpi eq, %c8_i32_15, %c0_i32_16 : i32
    %c1_i32_17 = arith.constant 1 : i32
    %58 = arith.select %57, %c1_i32_17, %c8_i32_15 : i32
    %59 = vector.broadcast %58 : i32 to vector<2x96x32xi32>
    %60 = arith.remsi %56, %59 : vector<2x96x32xi32>
    %c0_i32_18 = arith.constant 0 : i32
    %61 = vector.broadcast %c0_i32_18 : i32 to vector<2x96x32xi32>
    %62 = arith.cmpi ne, %60, %61 : vector<2x96x32xi32>
    %c0_i32_19 = arith.constant 0 : i32
    %63 = vector.broadcast %c0_i32_19 : i32 to vector<2x96x32xi32>
    %64 = arith.cmpi slt, %60, %63 : vector<2x96x32xi32>
    %c0_i32_20 = arith.constant 0 : i32
    %65 = arith.cmpi slt, %58, %c0_i32_20 : i32
    %66 = vector.broadcast %65 : i1 to vector<2x96x32xi1>
    %67 = vector.broadcast %66 : vector<2x96x32xi1> to vector<2x96x32xi1>
    %68 = arith.xori %64, %67 : vector<2x96x32xi1>
    %69 = arith.andi %68, %62 : vector<2x96x32xi1>
    %70 = vector.broadcast %58 : i32 to vector<2x96x32xi32>
    %71 = arith.addi %60, %70 : vector<2x96x32xi32>
    %72 = arith.select %69, %71, %60 : vector<2x96x32xi1>, vector<2x96x32xi32>
    %c7_i32_21 = arith.constant 7 : i32
    %73 = vector.broadcast %c7_i32_21 : i32 to vector<2x96x32xi32>
    %74 = arith.cmpi ne, %72, %73 : vector<2x96x32xi32>
    %cst_22 = arith.constant 0.000000e+00 : bf16
    %75 = vector.broadcast %cst_22 : bf16 to vector<2x96x32xbf16>
    %76 = arith.select %74, %55, %75 : vector<2x96x32xi1>, vector<2x96x32xbf16>
    %c0_i32_23 = arith.constant 0 : i32
    %77 = vector.broadcast %c0_i32_23 : i32 to vector<2x96x32xi32>
    %78 = arith.cmpi ne, %72, %77 : vector<2x96x32xi32>
    %cst_24 = arith.constant 0.000000e+00 : bf16
    %79 = vector.broadcast %cst_24 : bf16 to vector<2x96x32xbf16>
    %80 = arith.select %78, %55, %79 : vector<2x96x32xi1>, vector<2x96x32xbf16>
    %81 = vector.extract_strided_slice %76 {offsets = [0, 7, 0], sizes = [2, 64, 32], strides = [1, 1, 1]} : vector<2x96x32xbf16> to vector<2x64x32xbf16>
    %82 = vector.extract_strided_slice %55 {offsets = [0, 8, 0], sizes = [2, 64, 32], strides = [1, 1, 1]} : vector<2x96x32xbf16> to vector<2x64x32xbf16>
    %83 = vector.extract_strided_slice %80 {offsets = [0, 9, 0], sizes = [2, 64, 32], strides = [1, 1, 1]} : vector<2x96x32xbf16> to vector<2x64x32xbf16>
    %84 = vector.extract_strided_slice %76 {offsets = [0, 15, 0], sizes = [2, 64, 32], strides = [1, 1, 1]} : vector<2x96x32xbf16> to vector<2x64x32xbf16>
    %85 = vector.extract_strided_slice %55 {offsets = [0, 16, 0], sizes = [2, 64, 32], strides = [1, 1, 1]} : vector<2x96x32xbf16> to vector<2x64x32xbf16>
    %86 = vector.extract_strided_slice %80 {offsets = [0, 17, 0], sizes = [2, 64, 32], strides = [1, 1, 1]} : vector<2x96x32xbf16> to vector<2x64x32xbf16>
    %87 = vector.extract_strided_slice %76 {offsets = [0, 23, 0], sizes = [2, 64, 32], strides = [1, 1, 1]} : vector<2x96x32xbf16> to vector<2x64x32xbf16>
    %88 = vector.extract_strided_slice %55 {offsets = [0, 24, 0], sizes = [2, 64, 32], strides = [1, 1, 1]} : vector<2x96x32xbf16> to vector<2x64x32xbf16>
    %89 = vector.extract_strided_slice %80 {offsets = [0, 25, 0], sizes = [2, 64, 32], strides = [1, 1, 1]} : vector<2x96x32xbf16> to vector<2x64x32xbf16>
    %90 = tpu.concatenate %81, %82, %83, %84, %85, %86, %87, %88, %89 in 2 : vector<2x64x32xbf16>, vector<2x64x32xbf16>, vector<2x64x32xbf16>, vector<2x64x32xbf16>, vector<2x64x32xbf16>, vector<2x64x32xbf16>, vector<2x64x32xbf16>, vector<2x64x32xbf16>, vector<2x64x32xbf16> -> vector<2x64x288xbf16>
    %91 = vector.shape_cast %90 : vector<2x64x288xbf16> to vector<128x288xbf16>
    %c0_25 = arith.constant 0 : index
    %c0_26 = arith.constant 0 : index
    %92 = vector.load %arg5[%c0_25, %c0_26] : memref<288x32xbf16, #tpu.memory_space<vmem>>, vector<288x32xbf16>
    %cst_27 = arith.constant dense<0.000000e+00> : vector<128x32xf32>
    %93 = tpu.matmul %91, %92, %cst_27 {dimension_numbers = #tpu.dot_dimension_numbers<[1], [0], [0], [1], [0, 0, 1, 1], [], []>} : vector<128x288xbf16>, vector<288x32xbf16>, vector<128x32xf32> -> vector<128x32xf32>
    %c0_28 = arith.constant 0 : index
    %c0_29 = arith.constant 0 : index
    %94 = vector.load %arg6[%c0_28, %c0_29] : memref<1x32xf32, #tpu.memory_space<vmem>>, vector<1x32xf32>
    %95 = vector.broadcast %94 : vector<1x32xf32> to vector<128x32xf32>
    %96 = arith.addf %93, %95 : vector<128x32xf32>
    %97 = vector.shape_cast %96 : vector<128x32xf32> to vector<2x64x32xf32>
    %cst_30 = arith.constant dense<0.000000e+00> : vector<2x32xf32>
    %98 = vector.multi_reduction <add>, %97, %cst_30 [1] : vector<2x64x32xf32> to vector<2x32xf32>
    %cst_31 = arith.constant 6.400000e+01 : f32
    %99 = vector.broadcast %cst_31 : f32 to vector<2x32xf32>
    %100 = arith.divf %98, %99 : vector<2x32xf32>
    %c0_32 = arith.constant 0 : index
    %c0_33 = arith.constant 0 : index
    %101 = vector.load %arg7[%c0_32, %c0_33] : memref<32x2xf32, #tpu.memory_space<vmem>>, vector<32x2xf32>
    %cst_34 = arith.constant dense<0.000000e+00> : vector<2x2xf32>
    %102 = tpu.matmul %100, %101, %cst_34 {dimension_numbers = #tpu.dot_dimension_numbers<[1], [0], [0], [1], [0, 0, 1, 1], [], []>} : vector<2x32xf32>, vector<32x2xf32>, vector<2x2xf32> -> vector<2x2xf32>
    %cst_35 = arith.constant 0.000000e+00 : f32
    %103 = vector.broadcast %cst_35 : f32 to vector<2x2xf32>
    %104 = arith.maximumf %102, %103 : vector<2x2xf32>
    %c0_36 = arith.constant 0 : index
    %c0_37 = arith.constant 0 : index
    %105 = vector.load %arg8[%c0_36, %c0_37] : memref<2x32xf32, #tpu.memory_space<vmem>>, vector<2x32xf32>
    %cst_38 = arith.constant dense<0.000000e+00> : vector<2x32xf32>
    %106 = tpu.matmul %104, %105, %cst_38 {dimension_numbers = #tpu.dot_dimension_numbers<[1], [0], [0], [1], [0, 0, 1, 1], [], []>} : vector<2x2xf32>, vector<2x32xf32>, vector<2x32xf32> -> vector<2x32xf32>
    %107 = arith.negf %106 : vector<2x32xf32>
    %108 = math.exp %107 : vector<2x32xf32>
    %cst_39 = arith.constant 1.000000e+00 : f32
    %109 = vector.broadcast %cst_39 : f32 to vector<2x32xf32>
    %110 = arith.addf %109, %108 : vector<2x32xf32>
    %111 = arith.divf %109, %110 : vector<2x32xf32>
    %112 = vector.shape_cast %111 : vector<2x32xf32> to vector<2x1x32xf32>
    %113 = vector.broadcast %112 : vector<2x1x32xf32> to vector<2x64x32xf32>
    %114 = arith.mulf %97, %113 : vector<2x64x32xf32>
    %115 = vector.shape_cast %51 : vector<128x32xf32> to vector<2x64x32xf32>
    %116 = arith.addf %114, %115 : vector<2x64x32xf32>
    %cst_40 = arith.constant 0.000000e+00 : f32
    %117 = vector.broadcast %cst_40 : f32 to vector<2x64x32xf32>
    %118 = arith.maximumf %116, %117 : vector<2x64x32xf32>
    %c0_41 = arith.constant 0 : index
    %c0_42 = arith.constant 0 : index
    %c0_43 = arith.constant 0 : index
    %119 = vector.load %arg9[%c0_41, %c0_42, %c0_43] : memref<2x64x32xf32, #tpu.memory_space<vmem>>, vector<2x64x32xf32>
    tpu.vector_store %arg9[%c0_41, %c0_42, %c0_43], %118 {strides = array<i32>} : memref<2x64x32xf32, #tpu.memory_space<vmem>>, vector<2x64x32xf32>,
    return
  }
  func.func @transform_0(%arg0: i32) -> (i32, i32, i32) {
    %c0_i32 = arith.constant 0 : i32
    %c0_i32_0 = arith.constant 0 : i32
    %c0_i32_1 = arith.constant 0 : i32
    return %arg0, %c0_i32, %c0_i32_0 : i32, i32, i32
  }
  func.func @transform_1(%arg0: i32) -> (i32, i32) {
    %c0_i32 = arith.constant 0 : i32
    %c0_i32_0 = arith.constant 0 : i32
    %c0_i32_1 = arith.constant 0 : i32
    return %c0_i32, %c0_i32_0 : i32, i32
  }
  func.func @transform_2(%arg0: i32) -> (i32, i32) {
    %c0_i32 = arith.constant 0 : i32
    %c0_i32_0 = arith.constant 0 : i32
    %c0_i32_1 = arith.constant 0 : i32
    return %c0_i32, %c0_i32_0 : i32, i32
  }
  func.func @transform_3(%arg0: i32) -> (i32, i32) {
    %c0_i32 = arith.constant 0 : i32
    %c0_i32_0 = arith.constant 0 : i32
    %c0_i32_1 = arith.constant 0 : i32
    return %c0_i32, %c0_i32_0 : i32, i32
  }
  func.func @transform_4(%arg0: i32) -> (i32, i32) {
    %c0_i32 = arith.constant 0 : i32
    %c0_i32_0 = arith.constant 0 : i32
    %c0_i32_1 = arith.constant 0 : i32
    return %c0_i32, %c0_i32_0 : i32, i32
  }
  func.func @transform_5(%arg0: i32) -> (i32, i32) {
    %c0_i32 = arith.constant 0 : i32
    %c0_i32_0 = arith.constant 0 : i32
    %c0_i32_1 = arith.constant 0 : i32
    return %c0_i32, %c0_i32_0 : i32, i32
  }
  func.func @transform_6(%arg0: i32) -> (i32, i32) {
    %c0_i32 = arith.constant 0 : i32
    %c0_i32_0 = arith.constant 0 : i32
    %c0_i32_1 = arith.constant 0 : i32
    return %c0_i32, %c0_i32_0 : i32, i32
  }
  func.func @transform_7(%arg0: i32) -> (i32, i32) {
    %c0_i32 = arith.constant 0 : i32
    %c0_i32_0 = arith.constant 0 : i32
    %c0_i32_1 = arith.constant 0 : i32
    return %c0_i32, %c0_i32_0 : i32, i32
  }
  func.func @transform_8(%arg0: i32) -> (i32, i32, i32) {
    %c0_i32 = arith.constant 0 : i32
    %c0_i32_0 = arith.constant 0 : i32
    %c0_i32_1 = arith.constant 0 : i32
    return %arg0, %c0_i32, %c0_i32_0 : i32, i32, i32
  }
}

</mosaic_0001>

<llo_original>
// kernel: residual_block_forward.1
$region0: #{residual_block_forward.1}
  #allocation0 [shape = 'u32[]', space=smem, size = 0x4, offset = 0x4, fixed_abs, tag = 'smem constant byte address 0x4 - core index']
  #allocation1 [shape = 'u32[72,128]{1,0:T(1,128)}', space=vmem, size = 0x9000, scoped, tag = 'internal scratch']
  %s0 = inlined_call_operand.vmem [shape: bf16[2,64,16], index: 0, kind: input, shape index: {}]
  %s1 = inlined_call_operand.vmem [shape: bf16[144,64], index: 1, kind: input, shape index: {}]
  %s2 = inlined_call_operand.vmem [shape: f32[1,64], index: 2, kind: input, shape index: {}]
  %s3 = inlined_call_operand.vmem [shape: bf16[16,32], index: 3, kind: input, shape index: {}]
  %s4 = inlined_call_operand.vmem [shape: bf16[288,32], index: 4, kind: input, shape index: {}]
  %s5 = inlined_call_operand.vmem [shape: f32[1,32], index: 5, kind: input, shape index: {}]
  %s6 = inlined_call_operand.vmem [shape: f32[32,2], index: 6, kind: input, shape index: {}]
  %s7 = inlined_call_operand.vmem [shape: f32[2,32], index: 7, kind: input, shape index: {}]
  %s8 = inlined_call_operand.hbm [shape: f32[2,64,32], index: 8, kind: output, shape index: {}]
  %s9 = sld [smem:[#allocation0]]
  $region42: #{residual_block_forward.1} parent=0
    _
  %s11 = ssub.s32 1, %s9
  %s12 = scalar_select 0, %s11, %s9
  $region1: #{residual_block_forward.1} parent=0
    #allocation2 [shape = 'u8[65536]{0}', space=vmem, size = 0x10000, scoped, tag = 'output window, operand 0, single buffered']
    #allocation3 [shape = 's32[1]{0}', space=sflag, size = 0x4, scoped, tag = 'scoped memory for residual_block_forward.1']
    %13 = vsyncpa [#allocation3], 0
    // Predicated region
    $region2: #{residual_block_forward.1} parent=1 // pred_check
      _
    $region3: #{residual_block_forward.1} parent=1 // pred_check_branch
      %15 = sbr.rel (0) target = $region5
    $region4: #{residual_block_forward.1} parent=1 // pred_region
      _
    $region5: #{residual_block_forward.1} parent=1 // pred_fallthru
      _
    // Predicated region
    $region6: #{residual_block_forward.1} parent=1 // pred_check
      _
    $region7: #{residual_block_forward.1} parent=1 // pred_check_branch
      %17 = sbr.rel (0) target = $region9
    $region8: #{residual_block_forward.1} parent=1 // pred_region
      _
    $region9: #{residual_block_forward.1} parent=1 // pred_fallthru
      _
    // Predicated region
    $region10: #{residual_block_forward.1} parent=1 // pred_check
      _
    $region11: #{residual_block_forward.1} parent=1 // pred_check_branch
      %19 = sbr.rel (0) target = $region13
    $region12: #{residual_block_forward.1} parent=1 // pred_region
      _
    $region13: #{residual_block_forward.1} parent=1 // pred_fallthru
      _
    // Predicated region
    $region14: #{residual_block_forward.1} parent=1 // pred_check
      _
    $region15: #{residual_block_forward.1} parent=1 // pred_check_branch
      %21 = sbr.rel (0) target = $region17
    $region16: #{residual_block_forward.1} parent=1 // pred_region
      _
    $region17: #{residual_block_forward.1} parent=1 // pred_fallthru
      _
    // Predicated region
    $region18: #{residual_block_forward.1} parent=1 // pred_check
      _
    $region19: #{residual_block_forward.1} parent=1 // pred_check_branch
      %23 = sbr.rel (0) target = $region21
    $region20: #{residual_block_forward.1} parent=1 // pred_region
      _
    $region21: #{residual_block_forward.1} parent=1 // pred_fallthru
      _
    // Predicated region
    $region22: #{residual_block_forward.1} parent=1 // pred_check
      _
    $region23: #{residual_block_forward.1} parent=1 // pred_check_branch
      %25 = sbr.rel (0) target = $region25
    $region24: #{residual_block_forward.1} parent=1 // pred_region
      _
    $region25: #{residual_block_forward.1} parent=1 // pred_fallthru
      _
    // Predicated region
    $region26: #{residual_block_forward.1} parent=1 // pred_check
      _
    $region27: #{residual_block_forward.1} parent=1 // pred_check_branch
      %27 = sbr.rel (0) target = $region29
    $region28: #{residual_block_forward.1} parent=1 // pred_region
      _
    $region29: #{residual_block_forward.1} parent=1 // pred_fallthru
      _
    // Predicated region
    $region30: #{residual_block_forward.1} parent=1 // pred_check
      _
    $region31: #{residual_block_forward.1} parent=1 // pred_check_branch
      %29 = sbr.rel (0) target = $region33
    $region32: #{residual_block_forward.1} parent=1 // pred_region
      _
    $region33: #{residual_block_forward.1} parent=1 // pred_fallthru
      _
    %v33 = vld [vmem:[%s0] sm:$0xf]
    %v34 = vld [vmem:[%s0 + $0x4] sm:$0xf]
    %v35 = vld [vmem:[%s0 + $0x8] sm:$0xf]
    %v36 = vld [vmem:[%s0 + $0xc] sm:$0xf]
    %v37 = vld [vmem:[%s0 + $0x10] sm:$0xf]
    %v38 = vld [vmem:[%s0 + $0x14] sm:$0xf]
    %v39 = vld [vmem:[%s0 + $0x18] sm:$0xf]
    %v40 = vld [vmem:[%s0 + $0x1c] sm:$0xf]
    %v41 = vld [vmem:[%s0 + $0x20] sm:$0xf]
    %v42 = vld [vmem:[%s0 + $0x24] sm:$0xf]
    %v43 = vld [vmem:[%s0 + $0x28] sm:$0xf]
    %v44 = vld [vmem:[%s0 + $0x2c] sm:$0xf]
    %v45 = vld [vmem:[%s0 + $0x30] sm:$0xf]
    %v46 = vld [vmem:[%s0 + $0x34] sm:$0xf]
    %v47 = vld [vmem:[%s0 + $0x38] sm:$0xf]
    %v48 = vld [vmem:[%s0 + $0x3c] sm:$0xf]
    %v65 = vunpack.c.l.b16 %v33
    %v66 = vunpack.c.l.b16 %v34
    %v67 = vunpack.c.l.b16 %v35
    %v68 = vunpack.c.l.b16 %v36
    %v69 = vunpack.c.l.b16 %v37
    %v70 = vunpack.c.l.b16 %v38
    %v71 = vunpack.c.l.b16 %v39
    %v72 = vunpack.c.l.b16 %v40
    %v73 = vunpack.c.l.b16 %v41
    %v74 = vunpack.c.l.b16 %v42
    %v75 = vunpack.c.l.b16 %v43
    %v76 = vunpack.c.l.b16 %v44
    %v77 = vunpack.c.l.b16 %v45
    %v78 = vunpack.c.l.b16 %v46
    %v79 = vunpack.c.l.b16 %v47
    %v80 = vunpack.c.l.b16 %v48
    %v81 = vpack.c.b16 %v66, %v65
    %v82 = vpack.c.b16 %v68, %v67
    %v83 = vpack.c.b16 %v70, %v69
    %v84 = vpack.c.b16 %v72, %v71
    %v85 = vpack.c.b16 %v74, %v73
    %v86 = vpack.c.b16 %v76, %v75
    %v87 = vpack.c.b16 %v78, %v77
    %v88 = vpack.c.b16 %v80, %v79
    %v97 = vlaneseq
    %v98 = vshrl.u32 %v97, 7
    %v99 = vadd.s32 %v98, 16
    %v100 = vadd.s32 %v98, 24
    %v101 = vadd.s32 %v98, 32
    %v102 = vadd.s32 %v98, 40
    %v103 = vadd.s32 %v98, 48
    %v104 = vadd.s32 %v98, 56
    %v105 = vadd.s32 %v98, 64
    %v106 = vadd.s32 %v98, 72
    %vm107 = vcmp.lt.s32.totalorder %v99, 0
    %v108 = vsub.s32 0, %v99
    %v109 = vsel %vm107, %v108, %v99
    %v110 = vshrl.u32 %v109, 3
    %v111 = vand.u32 %v109, 7
    %v112 = vsub.s32 0, %v111
    %v113 = vsel %vm107, %v112, %v111
    %vm114 = vcmp.lt.s32.totalorder %v100, 0
    %v115 = vsub.s32 0, %v100
    %v116 = vsel %vm114, %v115, %v100
    %v117 = vshrl.u32 %v116, 3
    %v118 = vand.u32 %v116, 7
    %v119 = vsub.s32 0, %v118
    %v120 = vsel %vm114, %v119, %v118
    %vm121 = vcmp.lt.s32.totalorder %v101, 0
    %v122 = vsub.s32 0, %v101
    %v123 = vsel %vm121, %v122, %v101
    %v124 = vshrl.u32 %v123, 3
    %v125 = vand.u32 %v123, 7
    %v126 = vsub.s32 0, %v125
    %v127 = vsel %vm121, %v126, %v125
    %vm128 = vcmp.lt.s32.totalorder %v102, 0
    %v129 = vsub.s32 0, %v102
    %v130 = vsel %vm128, %v129, %v102
    %v131 = vshrl.u32 %v130, 3
    %v132 = vand.u32 %v130, 7
    %v133 = vsub.s32 0, %v132
    %v134 = vsel %vm128, %v133, %v132
    %vm135 = vcmp.lt.s32.totalorder %v103, 0
    %v136 = vsub.s32 0, %v103
    %v137 = vsel %vm135, %v136, %v103
    %v138 = vshrl.u32 %v137, 3
    %v139 = vand.u32 %v137, 7
    %v140 = vsub.s32 0, %v139
    %v141 = vsel %vm135, %v140, %v139
    %vm142 = vcmp.lt.s32.totalorder %v104, 0
    %v143 = vsub.s32 0, %v104
    %v144 = vsel %vm142, %v143, %v104
    %v145 = vshrl.u32 %v144, 3
    %v146 = vand.u32 %v144, 7
    %v147 = vsub.s32 0, %v146
    %v148 = vsel %vm142, %v147, %v146
    %vm149 = vcmp.lt.s32.totalorder %v105, 0
    %v150 = vsub.s32 0, %v105
    %v151 = vsel %vm149, %v150, %v105
    %v152 = vshrl.u32 %v151, 3
    %v153 = vand.u32 %v151, 7
    %v154 = vsub.s32 0, %v153
    %v155 = vsel %vm149, %v154, %v153
    %vm156 = vcmp.lt.s32.totalorder %v106, 0
    %v157 = vsub.s32 0, %v106
    %v158 = vsel %vm156, %v157, %v106
    %v159 = vshrl.u32 %v158, 3
    %v160 = vand.u32 %v158, 7
    %v161 = vsub.s32 0, %v160
    %v162 = vsel %vm156, %v161, %v160
    %vm163 = vcmp.ne.s32.totalorder %v113, 0
    %vm164 = vcmp.ne.s32.totalorder %v120, 0
    %vm165 = vcmp.ne.s32.totalorder %v127, 0
    %vm166 = vcmp.ne.s32.totalorder %v134, 0
    %vm167 = vcmp.ne.s32.totalorder %v141, 0
    %vm168 = vcmp.ne.s32.totalorder %v148, 0
    %vm169 = vcmp.ne.s32.totalorder %v155, 0
    %vm170 = vcmp.ne.s32.totalorder %v162, 0
    %vm171 = vcmp.lt.s32.totalorder %v113, 0
    %vm172 = vcmp.lt.s32.totalorder %v120, 0
    %vm173 = vcmp.lt.s32.totalorder %v127, 0
    %vm174 = vcmp.lt.s32.totalorder %v134, 0
    %vm175 = vcmp.lt.s32.totalorder %v141, 0
    %vm176 = vcmp.lt.s32.totalorder %v148, 0
    %vm177 = vcmp.lt.s32.totalorder %v155, 0
    %vm178 = vcmp.lt.s32.totalorder %v162, 0
    %vm179 = vmand %vm171, %vm163
    %vm180 = vmand %vm172, %vm164
    %vm181 = vmand %vm173, %vm165
    %vm182 = vmand %vm174, %vm166
    %vm183 = vmand %vm175, %vm167
    %vm184 = vmand %vm176, %vm168
    %vm185 = vmand %vm177, %vm169
    %vm186 = vmand %vm178, %vm170
    %v187 = vadd.s32 %v113, 8
    %v188 = vadd.s32 %v120, 8
    %v189 = vadd.s32 %v127, 8
    %v190 = vadd.s32 %v134, 8
    %v191 = vadd.s32 %v141, 8
    %v192 = vadd.s32 %v148, 8
    %v193 = vadd.s32 %v155, 8
    %v194 = vadd.s32 %v162, 8
    %v195 = vsel %vm179, %v187, %v113
    %v196 = vsel %vm180, %v188, %v120
    %v197 = vsel %vm181, %v189, %v127
    %v198 = vsel %vm182, %v190, %v134
    %v199 = vsel %vm183, %v191, %v141
    %v200 = vsel %vm184, %v192, %v148
    %v201 = vsel %vm185, %v193, %v155
    %v202 = vsel %vm186, %v194, %v162
    %vm203 = vcmp.ne.s32.totalorder %v195, 7
    %vm204 = vcmp.ne.s32.totalorder %v196, 7
    %vm205 = vcmp.ne.s32.totalorder %v197, 7
    %vm206 = vcmp.ne.s32.totalorder %v198, 7
    %vm207 = vcmp.ne.s32.totalorder %v199, 7
    %vm208 = vcmp.ne.s32.totalorder %v200, 7
    %vm209 = vcmp.ne.s32.totalorder %v201, 7
    %vm210 = vcmp.ne.s32.totalorder %v202, 7
    %vm211 = vmpackc.low %vm203, %vm203
    %vm212 = vmpackc.low %vm204, %vm204
    %vm213 = vmpackc.low %vm205, %vm205
    %vm214 = vmpackc.low %vm206, %vm206
    %vm215 = vmpackc.low %vm207, %vm207
    %vm216 = vmpackc.low %vm208, %vm208
    %vm217 = vmpackc.low %vm209, %vm209
    %vm218 = vmpackc.low %vm210, %vm210
    %v219 = vsel %vm211, 65537, 0
    %v220 = vsel %vm212, 65537, 0
    %v221 = vsel %vm213, 65537, 0
    %v222 = vsel %vm214, 65537, 0
    %v223 = vsel %vm215, 65537, 0
    %v224 = vsel %vm216, 65537, 0
    %v225 = vsel %vm217, 65537, 0
    %v226 = vsel %vm218, 65537, 0
    %v227 = vunpack.c.l.b16 %v219
    %v228 = vunpack.c.l.b16 %v220
    %v229 = vunpack.c.l.b16 %v221
    %v230 = vunpack.c.l.b16 %v222
    %v231 = vunpack.c.l.b16 %v223
    %v232 = vunpack.c.l.b16 %v224
    %v233 = vunpack.c.l.b16 %v225
    %v234 = vunpack.c.l.b16 %v226
    %v235 = vpack.c.b16 %v228, %v227
    %v236 = vpack.c.b16 %v230, %v229
    %v237 = vpack.c.b16 %v232, %v231
    %v238 = vpack.c.b16 %v234, %v233
    %v239 = vunpack.c.l.b16 %v235
    %v240 = vunpack.c.h.b16 %v235
    %v241 = vunpack.c.l.b16 0
    %v242 = vunpack.c.h.b16 0
    %vm243 = vcmp.ne.s32.totalorder %v239, %v241
    %vm244 = vcmp.ne.s32.totalorder %v240, %v242
    %vm245 = vmpackc.low %vm244, %vm243
    %v246 = vunpack.c.l.b16 %v236
    %v247 = vunpack.c.h.b16 %v236
    %v248 = vunpack.c.l.b16 0
    %v249 = vunpack.c.h.b16 0
    %vm250 = vcmp.ne.s32.totalorder %v246, %v248
    %vm251 = vcmp.ne.s32.totalorder %v247, %v249
    %vm252 = vmpackc.low %vm251, %vm250
    %v253 = vunpack.c.l.b16 %v237
    %v254 = vunpack.c.h.b16 %v237
    %v255 = vunpack.c.l.b16 0
    %v256 = vunpack.c.h.b16 0
    %vm257 = vcmp.ne.s32.totalorder %v253, %v255
    %vm258 = vcmp.ne.s32.totalorder %v254, %v256
    %vm259 = vmpackc.low %vm258, %vm257
    %v260 = vunpack.c.l.b16 %v238
    %v261 = vunpack.c.h.b16 %v238
    %v262 = vunpack.c.l.b16 0
    %v263 = vunpack.c.h.b16 0
    %vm264 = vcmp.ne.s32.totalorder %v260, %v262
    %vm265 = vcmp.ne.s32.totalorder %v261, %v263
    %vm266 = vmpackc.low %vm265, %vm264
    %v267 = vsel %vm245, %v81, 0
    %v268 = vsel %vm252, %v82, 0
    %v269 = vsel %vm259, %v83, 0
    %v270 = vsel %vm266, %v84, 0
    %v271 = vsel %vm245, %v85, 0
    %v272 = vsel %vm252, %v86, 0
    %v273 = vsel %vm259, %v87, 0
    %v274 = vsel %vm266, %v88, 0
    %vm275 = vcmp.ne.s32.totalorder %v195, 0
    %vm276 = vcmp.ne.s32.totalorder %v196, 0
    %vm277 = vcmp.ne.s32.totalorder %v197, 0
    %vm278 = vcmp.ne.s32.totalorder %v198, 0
    %vm279 = vcmp.ne.s32.totalorder %v199, 0
    %vm280 = vcmp.ne.s32.totalorder %v200, 0
    %vm281 = vcmp.ne.s32.totalorder %v201, 0
    %vm282 = vcmp.ne.s32.totalorder %v202, 0
    %vm283 = vmpackc.low %vm275, %vm275
    %vm284 = vmpackc.low %vm276, %vm276
    %vm285 = vmpackc.low %vm277, %vm277
    %vm286 = vmpackc.low %vm278, %vm278
    %vm287 = vmpackc.low %vm279, %vm279
    %vm288 = vmpackc.low %vm280, %vm280
    %vm289 = vmpackc.low %vm281, %vm281
    %vm290 = vmpackc.low %vm282, %vm282
    %v291 = vsel %vm283, 65537, 0
    %v292 = vsel %vm284, 65537, 0
    %v293 = vsel %vm285, 65537, 0
    %v294 = vsel %vm286, 65537, 0
    %v295 = vsel %vm287, 65537, 0
    %v296 = vsel %vm288, 65537, 0
    %v297 = vsel %vm289, 65537, 0
    %v298 = vsel %vm290, 65537, 0
    %v299 = vunpack.c.l.b16 %v291
    %v300 = vunpack.c.l.b16 %v292
    %v301 = vunpack.c.l.b16 %v293
    %v302 = vunpack.c.l.b16 %v294
    %v303 = vunpack.c.l.b16 %v295
    %v304 = vunpack.c.l.b16 %v296
    %v305 = vunpack.c.l.b16 %v297
    %v306 = vunpack.c.l.b16 %v298
    %v307 = vpack.c.b16 %v300, %v299
    %v308 = vpack.c.b16 %v302, %v301
    %v309 = vpack.c.b16 %v304, %v303
    %v310 = vpack.c.b16 %v306, %v305
    %v311 = vunpack.c.l.b16 %v307
    %v312 = vunpack.c.h.b16 %v307
    %v313 = vunpack.c.l.b16 0
    %v314 = vunpack.c.h.b16 0
    %vm315 = vcmp.ne.s32.totalorder %v311, %v313
    %vm316 = vcmp.ne.s32.totalorder %v312, %v314
    %vm317 = vmpackc.low %vm316, %vm315
    %v318 = vunpack.c.l.b16 %v308
    %v319 = vunpack.c.h.b16 %v308
    %v320 = vunpack.c.l.b16 0
    %v321 = vunpack.c.h.b16 0
    %vm322 = vcmp.ne.s32.totalorder %v318, %v320
    %vm323 = vcmp.ne.s32.totalorder %v319, %v321
    %vm324 = vmpackc.low %vm323, %vm322
    %v325 = vunpack.c.l.b16 %v309
    %v326 = vunpack.c.h.b16 %v309
    %v327 = vunpack.c.l.b16 0
    %v328 = vunpack.c.h.b16 0
    %vm329 = vcmp.ne.s32.totalorder %v325, %v327
    %vm330 = vcmp.ne.s32.totalorder %v326, %v328
    %vm331 = vmpackc.low %vm330, %vm329
    %v332 = vunpack.c.l.b16 %v310
    %v333 = vunpack.c.h.b16 %v310
    %v334 = vunpack.c.l.b16 0
    %v335 = vunpack.c.h.b16 0
    %vm336 = vcmp.ne.s32.totalorder %v332, %v334
    %vm337 = vcmp.ne.s32.totalorder %v333, %v335
    %vm338 = vmpackc.low %vm337, %vm336
    %v339 = vsel %vm317, %v81, 0
    %v340 = vsel %vm324, %v82, 0
    %v341 = vsel %vm331, %v83, 0
    %v342 = vsel %vm338, %v84, 0
    %v343 = vsel %vm317, %v85, 0
    %v344 = vsel %vm324, %v86, 0
    %v345 = vsel %vm331, %v87, 0
    %v346 = vsel %vm338, %v88, 0
    %vm347 = vsmask.f32 7424
    %v349 = vshrl.u32 0, 16
    %v351 = vshll.u32 0, 16
    %v353 = vrot.slane %v351, 1
    %v354 = vor.u32 %v349, %v353
    %v356 = vshll.u32 %v81, 16
    %v358 = vrot.slane %v356, 1
    %v359 = vsel %vm347, %v354, %v358
    %v360 = vshrl.u32 %v81, 16
    %v362 = vor.u32 %v360, %v358
    %v364 = vshll.u32 %v82, 16
    %v366 = vrot.slane %v364, 1
    %v367 = vsel %vm347, %v362, %v366
    %v368 = vshrl.u32 %v82, 16
    %v370 = vor.u32 %v368, %v366
    %v372 = vshll.u32 %v83, 16
    %v374 = vrot.slane %v372, 1
    %v375 = vsel %vm347, %v370, %v374
    %v376 = vshrl.u32 %v83, 16
    %v378 = vor.u32 %v376, %v374
    %v380 = vshll.u32 %v84, 16
    %v382 = vrot.slane %v380, 1
    %v383 = vsel %vm347, %v378, %v382
    %v384 = vshrl.u32 %v84, 16
    %v386 = vor.u32 %v384, %v382
    %v388 = vshll.u32 %v85, 16
    %v390 = vrot.slane %v388, 1
    %v391 = vsel %vm347, %v354, %v390
    %v392 = vshrl.u32 %v85, 16
    %v394 = vor.u32 %v392, %v390
    %v396 = vshll.u32 %v86, 16
    %v398 = vrot.slane %v396, 1
    %v399 = vsel %vm347, %v394, %v398
    %v400 = vshrl.u32 %v86, 16
    %v402 = vor.u32 %v400, %v398
    %v404 = vshll.u32 %v87, 16
    %v406 = vrot.slane %v404, 1
    %v407 = vsel %vm347, %v402, %v406
    %v408 = vshrl.u32 %v87, 16
    %v410 = vor.u32 %v408, %v406
    %v412 = vshll.u32 %v88, 16
    %v414 = vrot.slane %v412, 1
    %v415 = vsel %vm347, %v410, %v414
    %v416 = vshrl.u32 %v88, 16
    %v418 = vor.u32 %v416, %v414
    %419 = vrot.lane.b32.xlu0 %v359, 16
    %v420 = vpop.permute.xlu0 %419
    %421 = vrot.lane.b32.xlu0 %v367, 16
    %v422 = vpop.permute.xlu0 %421
    %423 = vrot.lane.b32.xlu0 %v375, 16
    %v424 = vpop.permute.xlu0 %423
    %425 = vrot.lane.b32.xlu0 %v383, 16
    %v426 = vpop.permute.xlu0 %425
    %427 = vrot.lane.b32.xlu0 %v386, 16
    %v428 = vpop.permute.xlu0 %427
    %429 = vrot.lane.b32.xlu0 %v391, 16
    %v430 = vpop.permute.xlu0 %429
    %431 = vrot.lane.b32.xlu0 %v399, 16
    %v432 = vpop.permute.xlu0 %431
    %433 = vrot.lane.b32.xlu0 %v407, 16
    %v434 = vpop.permute.xlu0 %433
    %435 = vrot.lane.b32.xlu0 %v415, 16
    %v436 = vpop.permute.xlu0 %435
    %437 = vrot.lane.b32.xlu0 %v418, 16
    %v438 = vpop.permute.xlu0 %437
    %vm448 = vcmask 1046528
    %v449 = vrot.slane 0, 1
    %v450 = vrot.slane %v339, 1
    %v451 = vsel %vm448, %v449, %v450
    %v452 = vrot.slane %v340, 1
    %v453 = vsel %vm448, %v450, %v452
    %v454 = vrot.slane %v341, 1
    %v455 = vsel %vm448, %v452, %v454
    %v456 = vrot.slane %v342, 1
    %v457 = vsel %vm448, %v454, %v456
    %v458 = vrot.slane %v343, 1
    %v459 = vsel %vm448, %v449, %v458
    %v460 = vrot.slane %v344, 1
    %v461 = vsel %vm448, %v458, %v460
    %v462 = vrot.slane %v345, 1
    %v463 = vsel %vm448, %v460, %v462
    %v464 = vrot.slane %v346, 1
    %v465 = vsel %vm448, %v462, %v464
    %466 = vrot.lane.b32.xlu0 %v451, 32
    %v467 = vpop.permute.xlu0 %466
    %468 = vrot.lane.b32.xlu0 %v453, 32
    %v469 = vpop.permute.xlu0 %468
    %470 = vrot.lane.b32.xlu0 %v455, 32
    %v471 = vpop.permute.xlu0 %470
    %472 = vrot.lane.b32.xlu0 %v457, 32
    %v473 = vpop.permute.xlu0 %472
    %474 = vrot.lane.b32.xlu0 %v456, 32
    %v475 = vpop.permute.xlu0 %474
    %476 = vrot.lane.b32.xlu0 %v459, 32
    %v477 = vpop.permute.xlu0 %476
    %478 = vrot.lane.b32.xlu0 %v461, 32
    %v479 = vpop.permute.xlu0 %478
    %480 = vrot.lane.b32.xlu0 %v463, 32
    %v481 = vpop.permute.xlu0 %480
    %482 = vrot.lane.b32.xlu0 %v465, 32
    %v483 = vpop.permute.xlu0 %482
    %484 = vrot.lane.b32.xlu0 %v464, 32
    %v485 = vpop.permute.xlu0 %484
    %vm494 = vcmask 1043456
    %v495 = vrot.slane 0, 4
    %v496 = vrot.slane %v267, 4
    %v497 = vsel %vm494, %v495, %v496
    %v498 = vrot.slane %v268, 4
    %v499 = vsel %vm494, %v496, %v498
    %v500 = vrot.slane %v269, 4
    %v501 = vsel %vm494, %v498, %v500
    %v502 = vrot.slane %v270, 4
    %v503 = vsel %vm494, %v500, %v502
    %v504 = vrot.slane %v271, 4
    %v505 = vsel %vm494, %v495, %v504
    %v506 = vrot.slane %v272, 4
    %v507 = vsel %vm494, %v504, %v506
    %v508 = vrot.slane %v273, 4
    %v509 = vsel %vm494, %v506, %v508
    %v510 = vrot.slane %v274, 4
    %v511 = vsel %vm494, %v508, %v510
    %512 = vrot.lane.b32.xlu0 %v497, 48
    %v513 = vpop.permute.xlu0 %512
    %514 = vrot.lane.b32.xlu0 %v499, 48
    %v515 = vpop.permute.xlu0 %514
    %516 = vrot.lane.b32.xlu0 %v501, 48
    %v517 = vpop.permute.xlu0 %516
    %518 = vrot.lane.b32.xlu0 %v503, 48
    %v519 = vpop.permute.xlu0 %518
    %520 = vrot.lane.b32.xlu0 %v502, 48
    %v521 = vpop.permute.xlu0 %520
    %522 = vrot.lane.b32.xlu0 %v505, 48
    %v523 = vpop.permute.xlu0 %522
    %524 = vrot.lane.b32.xlu0 %v507, 48
    %v525 = vpop.permute.xlu0 %524
    %526 = vrot.lane.b32.xlu0 %v509, 48
    %v527 = vpop.permute.xlu0 %526
    %528 = vrot.lane.b32.xlu0 %v511, 48
    %v529 = vpop.permute.xlu0 %528
    %530 = vrot.lane.b32.xlu0 %v510, 48
    %v531 = vpop.permute.xlu0 %530
    %vm532 = vsmask.f32 3328
    %v533 = vrot.slane %v360, 4
    %v534 = vrot.slane %v356, 5
    %v535 = vor.u32 %v533, %v534
    %v536 = vrot.slane %v368, 4
    %v537 = vrot.slane %v364, 5
    %v538 = vor.u32 %v536, %v537
    %v539 = vsel %vm532, %v535, %v538
    %v540 = vrot.slane %v376, 4
    %v541 = vrot.slane %v372, 5
    %v542 = vor.u32 %v540, %v541
    %v543 = vsel %vm532, %v538, %v542
    %v544 = vrot.slane %v384, 4
    %v545 = vrot.slane %v380, 5
    %v546 = vor.u32 %v544, %v545
    %v547 = vsel %vm532, %v542, %v546
    %v548 = vrot.slane %v392, 4
    %v549 = vrot.slane %v388, 5
    %v550 = vor.u32 %v548, %v549
    %v551 = vrot.slane %v400, 4
    %v552 = vrot.slane %v396, 5
    %v553 = vor.u32 %v551, %v552
    %v554 = vsel %vm532, %v550, %v553
    %v555 = vrot.slane %v408, 4
    %v556 = vrot.slane %v404, 5
    %v557 = vor.u32 %v555, %v556
    %v558 = vsel %vm532, %v553, %v557
    %v559 = vrot.slane %v416, 4
    %v560 = vrot.slane %v412, 5
    %v561 = vor.u32 %v559, %v560
    %v562 = vsel %vm532, %v557, %v561
    %563 = vrot.lane.b32.xlu0 %v535, 64
    %v564 = vpop.permute.xlu0 %563
    %565 = vrot.lane.b32.xlu0 %v539, 64
    %v566 = vpop.permute.xlu0 %565
    %567 = vrot.lane.b32.xlu0 %v543, 64
    %v568 = vpop.permute.xlu0 %567
    %569 = vrot.lane.b32.xlu0 %v547, 64
    %v570 = vpop.permute.xlu0 %569
    %571 = vrot.lane.b32.xlu0 %v546, 64
    %v572 = vpop.permute.xlu0 %571
    %573 = vrot.lane.b32.xlu0 %v550, 64
    %v574 = vpop.permute.xlu0 %573
    %575 = vrot.lane.b32.xlu0 %v554, 64
    %v576 = vpop.permute.xlu0 %575
    %577 = vrot.lane.b32.xlu0 %v558, 64
    %v578 = vpop.permute.xlu0 %577
    %579 = vrot.lane.b32.xlu0 %v562, 64
    %v580 = vpop.permute.xlu0 %579
    %581 = vrot.lane.b32.xlu0 %v561, 64
    %v582 = vpop.permute.xlu0 %581
    %vm583 = vcmask 1042432
    %v584 = vrot.slane %v339, 5
    %v585 = vrot.slane %v340, 5
    %v586 = vsel %vm583, %v584, %v585
    %v587 = vrot.slane %v341, 5
    %v588 = vsel %vm583, %v585, %v587
    %v589 = vrot.slane %v342, 5
    %v590 = vsel %vm583, %v587, %v589
    %v591 = vrot.slane 0, 5
    %v592 = vsel %vm583, %v589, %v591
    %v593 = vrot.slane %v343, 5
    %v594 = vrot.slane %v344, 5
    %v595 = vsel %vm583, %v593, %v594
    %v596 = vrot.slane %v345, 5
    %v597 = vsel %vm583, %v594, %v596
    %v598 = vrot.slane %v346, 5
    %v599 = vsel %vm583, %v596, %v598
    %v600 = vsel %vm583, %v598, %v591
    %601 = vrot.lane.b32.xlu0 %v584, 80
    %v602 = vpop.permute.xlu0 %601
    %603 = vrot.lane.b32.xlu0 %v586, 80
    %v604 = vpop.permute.xlu0 %603
    %605 = vrot.lane.b32.xlu0 %v588, 80
    %v606 = vpop.permute.xlu0 %605
    %607 = vrot.lane.b32.xlu0 %v590, 80
    %v608 = vpop.permute.xlu0 %607
    %609 = vrot.lane.b32.xlu0 %v592, 80
    %v610 = vpop.permute.xlu0 %609
    %611 = vrot.lane.b32.xlu0 %v593, 80
    %v612 = vpop.permute.xlu0 %611
    %613 = vrot.lane.b32.xlu0 %v595, 80
    %v614 = vpop.permute.xlu0 %613
    %615 = vrot.lane.b32.xlu0 %v597, 80
    %v616 = vpop.permute.xlu0 %615
    %617 = vrot.lane.b32.xlu0 %v599, 80
    %v618 = vpop.permute.xlu0 %617
    %619 = vrot.lane.b32.xlu0 %v600, 80
    %v620 = vpop.permute.xlu0 %619
    %621 = vrot.lane.b32.xlu0 %v267, 96
    %v622 = vpop.permute.xlu0 %621
    %623 = vrot.lane.b32.xlu0 %v268, 96
    %v624 = vpop.permute.xlu0 %623
    %625 = vrot.lane.b32.xlu0 %v269, 96
    %v626 = vpop.permute.xlu0 %625
    %627 = vrot.lane.b32.xlu0 %v270, 96
    %v628 = vpop.permute.xlu0 %627
    %629 = vrot.lane.b32.xlu0 0, 96
    %v630 = vpop.permute.xlu0 %629
    %631 = vrot.lane.b32.xlu0 %v271, 96
    %v632 = vpop.permute.xlu0 %631
    %633 = vrot.lane.b32.xlu0 %v272, 96
    %v634 = vpop.permute.xlu0 %633
    %635 = vrot.lane.b32.xlu0 %v273, 96
    %v636 = vpop.permute.xlu0 %635
    %637 = vrot.lane.b32.xlu0 %v274, 96
    %v638 = vpop.permute.xlu0 %637
    %v639 = vsel %vm347, %v386, %v353
    %v640 = vsel %vm347, %v418, %v353
    %641 = vrot.lane.b32.xlu0 %v367, 112
    %v642 = vpop.permute.xlu0 %641
    %643 = vrot.lane.b32.xlu0 %v375, 112
    %v644 = vpop.permute.xlu0 %643
    %645 = vrot.lane.b32.xlu0 %v383, 112
    %v646 = vpop.permute.xlu0 %645
    %647 = vrot.lane.b32.xlu0 %v639, 112
    %v648 = vpop.permute.xlu0 %647
    %649 = vrot.lane.b32.xlu0 %v354, 112
    %v650 = vpop.permute.xlu0 %649
    %651 = vrot.lane.b32.xlu0 %v399, 112
    %v652 = vpop.permute.xlu0 %651
    %653 = vrot.lane.b32.xlu0 %v407, 112
    %v654 = vpop.permute.xlu0 %653
    %655 = vrot.lane.b32.xlu0 %v415, 112
    %v656 = vpop.permute.xlu0 %655
    %657 = vrot.lane.b32.xlu0 %v640, 112
    %v658 = vpop.permute.xlu0 %657
    %v659 = vsel %vm448, %v456, %v449
    %v660 = vsel %vm448, %v464, %v449
    %vm661 = vcmask 130048
    %v663 = vsel %vm661, 0, %v420
    %v666 = vsel %vm661, %v267, %v422
    %v669 = vsel %vm661, %v268, %v424
    %v672 = vsel %vm661, %v269, %v426
    %v675 = vsel %vm661, %v270, %v428
    %v677 = vsel %vm661, 0, %v430
    %v680 = vsel %vm661, %v271, %v432
    %v683 = vsel %vm661, %v272, %v434
    %v686 = vsel %vm661, %v273, %v436
    %v689 = vsel %vm661, %v274, %v438
    %vm690 = vcmask 261120
    %v692 = vsel %vm690, %v663, %v467
    %v694 = vsel %vm690, %v666, %v469
    %v696 = vsel %vm690, %v669, %v471
    %v698 = vsel %vm690, %v672, %v473
    %v700 = vsel %vm690, %v675, %v475
    %v702 = vsel %vm690, %v677, %v477
    %v704 = vsel %vm690, %v680, %v479
    %v706 = vsel %vm690, %v683, %v481
    %v708 = vsel %vm690, %v686, %v483
    %v710 = vsel %vm690, %v689, %v485
    %vm711 = vcmask 392192
    %v713 = vsel %vm711, %v692, %v513
    %v715 = vsel %vm711, %v694, %v515
    %v717 = vsel %vm711, %v696, %v517
    %v719 = vsel %vm711, %v698, %v519
    %v721 = vsel %vm711, %v700, %v521
    %v723 = vsel %vm711, %v702, %v523
    %v725 = vsel %vm711, %v704, %v525
    %v727 = vsel %vm711, %v706, %v527
    %v729 = vsel %vm711, %v708, %v529
    %v731 = vsel %vm711, %v710, %v531
    %vm732 = vcmask 523264
    %v734 = vsel %vm732, %v713, %v564
    %v736 = vsel %vm732, %v715, %v566
    %v738 = vsel %vm732, %v717, %v568
    %v740 = vsel %vm732, %v719, %v570
    %v742 = vsel %vm732, %v721, %v572
    %v744 = vsel %vm732, %v723, %v574
    %v746 = vsel %vm732, %v725, %v576
    %v748 = vsel %vm732, %v727, %v578
    %v750 = vsel %vm732, %v729, %v580
    %v752 = vsel %vm732, %v731, %v582
    %vm753 = vcmask 654336
    %v755 = vsel %vm753, %v734, %v602
    %v757 = vsel %vm753, %v736, %v604
    %v759 = vsel %vm753, %v738, %v606
    %v761 = vsel %vm753, %v740, %v608
    %v763 = vsel %vm753, %v742, %v610
    %v765 = vsel %vm753, %v744, %v612
    %v767 = vsel %vm753, %v746, %v614
    %v769 = vsel %vm753, %v748, %v616
    %v771 = vsel %vm753, %v750, %v618
    %v773 = vsel %vm753, %v752, %v620
    %vm774 = vcmask 785408
    %v776 = vsel %vm774, %v755, %v622
    %v778 = vsel %vm774, %v757, %v624
    %v780 = vsel %vm774, %v759, %v626
    %v782 = vsel %vm774, %v761, %v628
    %v784 = vsel %vm774, %v763, %v630
    %v786 = vsel %vm774, %v765, %v632
    %v788 = vsel %vm774, %v767, %v634
    %v790 = vsel %vm774, %v769, %v636
    %v792 = vsel %vm774, %v771, %v638
    %v793 = vsel %vm774, %v773, %v630
    %vm794 = vcmask 916480
    %v796 = vsel %vm794, %v776, %v642
    %v798 = vsel %vm794, %v778, %v644
    %v800 = vsel %vm794, %v780, %v646
    %v802 = vsel %vm794, %v782, %v648
    %v804 = vsel %vm794, %v784, %v650
    %v806 = vsel %vm794, %v786, %v652
    %v808 = vsel %vm794, %v788, %v654
    %v810 = vsel %vm794, %v790, %v656
    %v812 = vsel %vm794, %v792, %v658
    %v813 = vsel %vm794, %v793, %v650
    %vm814 = vsmask.f32 4352
    %v815 = vshrl.u32 %v796, 16
    %v817 = vrot.slane %v815, 3
    %v818 = vshll.u32 %v796, 16
    %v820 = vrot.slane %v818, 4
    %v821 = vor.u32 %v817, %v820
    %v822 = vshrl.u32 %v798, 16
    %v824 = vrot.slane %v822, 3
    %v825 = vshll.u32 %v798, 16
    %v827 = vrot.slane %v825, 4
    %v828 = vor.u32 %v824, %v827
    %v829 = vsel %vm814, %v821, %v828
    %v831 = vshrl.u32 %v453, 16
    %v833 = vrot.slane %v831, 3
    %v834 = vshll.u32 %v453, 16
    %v836 = vrot.slane %v834, 4
    %v837 = vor.u32 %v833, %v836
    %v839 = vshrl.u32 %v455, 16
    %v841 = vrot.slane %v839, 3
    %v842 = vshll.u32 %v455, 16
    %v844 = vrot.slane %v842, 4
    %v845 = vor.u32 %v841, %v844
    %v846 = vsel %vm814, %v837, %v845
    %v847 = vshrl.u32 %v800, 16
    %v849 = vrot.slane %v847, 3
    %v850 = vshll.u32 %v800, 16
    %v852 = vrot.slane %v850, 4
    %v853 = vor.u32 %v849, %v852
    %v854 = vsel %vm814, %v828, %v853
    %v856 = vshrl.u32 %v457, 16
    %v858 = vrot.slane %v856, 3
    %v859 = vshll.u32 %v457, 16
    %v861 = vrot.slane %v859, 4
    %v862 = vor.u32 %v858, %v861
    %v863 = vsel %vm814, %v845, %v862
    %v864 = vshrl.u32 %v802, 16
    %v866 = vrot.slane %v864, 3
    %v867 = vshll.u32 %v802, 16
    %v869 = vrot.slane %v867, 4
    %v870 = vor.u32 %v866, %v869
    %v871 = vsel %vm814, %v853, %v870
    %v873 = vshrl.u32 %v659, 16
    %v875 = vrot.slane %v873, 3
    %v876 = vshll.u32 %v659, 16
    %v878 = vrot.slane %v876, 4
    %v879 = vor.u32 %v875, %v878
    %v880 = vsel %vm814, %v862, %v879
    %v881 = vshrl.u32 %v804, 16
    %v883 = vrot.slane %v881, 3
    %v884 = vshll.u32 %v804, 16
    %v886 = vrot.slane %v884, 4
    %v887 = vor.u32 %v883, %v886
    %v888 = vsel %vm814, %v870, %v887
    %v890 = vshrl.u32 %v449, 16
    %v892 = vrot.slane %v890, 3
    %v893 = vshll.u32 %v449, 16
    %v895 = vrot.slane %v893, 4
    %v896 = vor.u32 %v892, %v895
    %v897 = vsel %vm814, %v879, %v896
    %v898 = vshrl.u32 %v806, 16
    %v900 = vrot.slane %v898, 3
    %v901 = vshll.u32 %v806, 16
    %v903 = vrot.slane %v901, 4
    %v904 = vor.u32 %v900, %v903
    %v905 = vshrl.u32 %v808, 16
    %v907 = vrot.slane %v905, 3
    %v908 = vshll.u32 %v808, 16
    %v910 = vrot.slane %v908, 4
    %v911 = vor.u32 %v907, %v910
    %v912 = vsel %vm814, %v904, %v911
    %v914 = vshrl.u32 %v461, 16
    %v916 = vrot.slane %v914, 3
    %v917 = vshll.u32 %v461, 16
    %v919 = vrot.slane %v917, 4
    %v920 = vor.u32 %v916, %v919
    %v922 = vshrl.u32 %v463, 16
    %v924 = vrot.slane %v922, 3
    %v925 = vshll.u32 %v463, 16
    %v927 = vrot.slane %v925, 4
    %v928 = vor.u32 %v924, %v927
    %v929 = vsel %vm814, %v920, %v928
    %v930 = vshrl.u32 %v810, 16
    %v932 = vrot.slane %v930, 3
    %v933 = vshll.u32 %v810, 16
    %v935 = vrot.slane %v933, 4
    %v936 = vor.u32 %v932, %v935
    %v937 = vsel %vm814, %v911, %v936
    %v939 = vshrl.u32 %v465, 16
    %v941 = vrot.slane %v939, 3
    %v942 = vshll.u32 %v465, 16
    %v944 = vrot.slane %v942, 4
    %v945 = vor.u32 %v941, %v944
    %v946 = vsel %vm814, %v928, %v945
    %v947 = vshrl.u32 %v812, 16
    %v949 = vrot.slane %v947, 3
    %v950 = vshll.u32 %v812, 16
    %v952 = vrot.slane %v950, 4
    %v953 = vor.u32 %v949, %v952
    %v954 = vsel %vm814, %v936, %v953
    %v956 = vshrl.u32 %v660, 16
    %v958 = vrot.slane %v956, 3
    %v959 = vshll.u32 %v660, 16
    %v961 = vrot.slane %v959, 4
    %v962 = vor.u32 %v958, %v961
    %v963 = vsel %vm814, %v945, %v962
    %v964 = vshrl.u32 %v813, 16
    %v966 = vrot.slane %v964, 3
    %v967 = vshll.u32 %v813, 16
    %v969 = vrot.slane %v967, 4
    %v970 = vor.u32 %v966, %v969
    %v971 = vsel %vm814, %v953, %v970
    %v972 = vsel %vm814, %v962, %v896
    %v981 = vld [vmem:[%s1] sm:$0xf]
    %v982 = vld [vmem:[%s1 + $0x4] sm:$0xf]
    %v983 = vld [vmem:[%s1 + $0x8] sm:$0xf]
    %v984 = vld [vmem:[%s1 + $0xc] sm:$0xf]
    %v985 = vld [vmem:[%s1 + $0x10] sm:$0xf]
    %v986 = vld [vmem:[%s1 + $0x14] sm:$0xf]
    %v987 = vld [vmem:[%s1 + $0x18] sm:$0xf]
    %v988 = vld [vmem:[%s1 + $0x1c] sm:$0xf]
    %v989 = vld [vmem:[%s1 + $0x20] sm:$0xf]
    %v990 = vld [vmem:[%s1 + $0x24] sm:$0xf]
    %v991 = vld [vmem:[%s1 + $0x28] sm:$0xf]
    %v992 = vld [vmem:[%s1 + $0x2c] sm:$0xf]
    %v993 = vld [vmem:[%s1 + $0x30] sm:$0xf]
    %v994 = vld [vmem:[%s1 + $0x34] sm:$0xf]
    %v995 = vld [vmem:[%s1 + $0x38] sm:$0xf]
    %v996 = vld [vmem:[%s1 + $0x3c] sm:$0xf]
    %v997 = vld [vmem:[%s1 + $0x40] sm:$0xf]
    %v998 = vld [vmem:[%s1 + $0x44] sm:$0xf]
    %v1017 = vunpack.c.l.b16 %v981
    %v1018 = vunpack.c.l.b16 %v982
    %v1019 = vunpack.c.l.b16 %v983
    %v1020 = vunpack.c.l.b16 %v984
    %v1021 = vunpack.c.l.b16 %v985
    %v1022 = vunpack.c.l.b16 %v986
    %v1023 = vunpack.c.l.b16 %v987
    %v1024 = vunpack.c.l.b16 %v988
    %v1025 = vunpack.c.l.b16 %v989
    %v1026 = vunpack.c.l.b16 %v990
    %v1027 = vunpack.c.l.b16 %v991
    %v1028 = vunpack.c.l.b16 %v992
    %v1029 = vunpack.c.l.b16 %v993
    %v1030 = vunpack.c.l.b16 %v994
    %v1031 = vunpack.c.l.b16 %v995
    %v1032 = vunpack.c.l.b16 %v996
    %v1033 = vunpack.c.l.b16 %v997
    %v1034 = vunpack.c.l.b16 %v998
    %v1035 = vpack.c.b16 %v1018, %v1017
    %v1036 = vpack.c.b16 %v1020, %v1019
    %v1037 = vpack.c.b16 %v1022, %v1021
    %v1038 = vpack.c.b16 %v1024, %v1023
    %v1039 = vpack.c.b16 %v1026, %v1025
    %v1040 = vpack.c.b16 %v1028, %v1027
    %v1041 = vpack.c.b16 %v1030, %v1029
    %v1042 = vpack.c.b16 %v1032, %v1031
    %v1043 = vpack.c.b16 %v1034, %v1033
    %v1054 = vsel %vm661, %v846, 0
    %v1057 = vsel %vm661, %v863, 0
    %v1060 = vsel %vm661, %v880, 0
    %v1063 = vsel %vm661, %v897, 0
    %v1066 = vsel %vm661, %v929, 0
    %v1069 = vsel %vm661, %v946, 0
    %v1072 = vsel %vm661, %v963, 0
    %v1075 = vsel %vm661, %v972, 0
    %1077 = vmatpush.bf16.msra.mxu0 %v1042
    %1078 = vmatpush.bf16.msra.mxu0 %v1041
    %1079 = vmatpush.bf16.msra.mxu0 %v1040
    %1080 = vmatpush.bf16.msra.mxu0 %v1039
    %1081 = vmatpush.bf16.msra.mxu0 %v1038
    %1082 = vmatpush.bf16.msra.mxu0 %v1037
    %1083 = vmatpush.bf16.msra.mxu0 %v1036
    %1084 = vmatpush.bf16.msra.mxu0 %v1035
    %1085 = vmatmul.bf16.gmra.mxu0 %v829
    %v1086 = vpop.f32.mrf.mxu0
    %v1087 = vadd.f32 0.0, %v1086
    %v1088 = vpop.f32.mrf.mxu0
    %v1089 = vadd.f32 0.0, %v1088
    %1090 = vmatmul.bf16.gmra.mxu0 %v854
    %v1091 = vpop.f32.mrf.mxu0
    %v1092 = vadd.f32 0.0, %v1091
    %v1093 = vpop.f32.mrf.mxu0
    %v1094 = vadd.f32 0.0, %v1093
    %1095 = vmatmul.bf16.gmra.mxu0 %v871
    %v1096 = vpop.f32.mrf.mxu0
    %v1097 = vadd.f32 0.0, %v1096
    %v1098 = vpop.f32.mrf.mxu0
    %v1099 = vadd.f32 0.0, %v1098
    %1100 = vmatmul.bf16.gmra.mxu0 %v888
    %v1101 = vpop.f32.mrf.mxu0
    %v1102 = vadd.f32 0.0, %v1101
    %v1103 = vpop.f32.mrf.mxu0
    %v1104 = vadd.f32 0.0, %v1103
    %1105 = vmatmul.bf16.gmra.mxu0 %v912
    %v1106 = vpop.f32.mrf.mxu0
    %v1107 = vadd.f32 0.0, %v1106
    %v1108 = vpop.f32.mrf.mxu0
    %v1109 = vadd.f32 0.0, %v1108
    %1110 = vmatmul.bf16.gmra.mxu0 %v937
    %v1111 = vpop.f32.mrf.mxu0
    %v1112 = vadd.f32 0.0, %v1111
    %v1113 = vpop.f32.mrf.mxu0
    %v1114 = vadd.f32 0.0, %v1113
    %1115 = vmatmul.bf16.gmra.mxu0 %v954
    %v1116 = vpop.f32.mrf.mxu0
    %v1117 = vadd.f32 0.0, %v1116
    %v1118 = vpop.f32.mrf.mxu0
    %v1119 = vadd.f32 0.0, %v1118
    %1120 = vmatmul.bf16.gmra.mxu0 %v971
    %v1121 = vpop.f32.mrf.mxu0
    %v1122 = vadd.f32 0.0, %v1121
    %v1123 = vpop.f32.mrf.mxu0
    %v1124 = vadd.f32 0.0, %v1123
    %1125 = vdwg.mxu0
    %1126 = vmatpush.bf16.msra.mxu0 0
    %1127 = vmatpush.bf16.msra.mxu0 0
    %1128 = vmatpush.bf16.msra.mxu0 0
    %1129 = vmatpush.bf16.msra.mxu0 0
    %1130 = vmatpush.bf16.msra.mxu0 0
    %1131 = vmatpush.bf16.msra.mxu0 0
    %1132 = vmatpush.bf16.msra.mxu0 0
    %1133 = vmatpush.bf16.msra.mxu0 %v1043
    %1134 = vmatmul.bf16.gmra.mxu0 %v1054
    %v1135 = vpop.f32.mrf.mxu0
    %v1136 = vadd.f32 %v1087, %v1135
    %v1137 = vpop.f32.mrf.mxu0
    %v1138 = vadd.f32 %v1089, %v1137
    %1139 = vmatmul.bf16.gmra.mxu0 %v1057
    %v1140 = vpop.f32.mrf.mxu0
    %v1141 = vadd.f32 %v1092, %v1140
    %v1142 = vpop.f32.mrf.mxu0
    %v1143 = vadd.f32 %v1094, %v1142
    %1144 = vmatmul.bf16.gmra.mxu0 %v1060
    %v1145 = vpop.f32.mrf.mxu0
    %v1146 = vadd.f32 %v1097, %v1145
    %v1147 = vpop.f32.mrf.mxu0
    %v1148 = vadd.f32 %v1099, %v1147
    %1149 = vmatmul.bf16.gmra.mxu0 %v1063
    %v1150 = vpop.f32.mrf.mxu0
    %v1151 = vadd.f32 %v1102, %v1150
    %v1152 = vpop.f32.mrf.mxu0
    %v1153 = vadd.f32 %v1104, %v1152
    %1154 = vmatmul.bf16.gmra.mxu0 %v1066
    %v1155 = vpop.f32.mrf.mxu0
    %v1156 = vadd.f32 %v1107, %v1155
    %v1157 = vpop.f32.mrf.mxu0
    %v1158 = vadd.f32 %v1109, %v1157
    %1159 = vmatmul.bf16.gmra.mxu0 %v1069
    %v1160 = vpop.f32.mrf.mxu0
    %v1161 = vadd.f32 %v1112, %v1160
    %v1162 = vpop.f32.mrf.mxu0
    %v1163 = vadd.f32 %v1114, %v1162
    %1164 = vmatmul.bf16.gmra.mxu0 %v1072
    %v1165 = vpop.f32.mrf.mxu0
    %v1166 = vadd.f32 %v1117, %v1165
    %v1167 = vpop.f32.mrf.mxu0
    %v1168 = vadd.f32 %v1119, %v1167
    %1169 = vmatmul.bf16.gmra.mxu0 %v1075
    %v1170 = vpop.f32.mrf.mxu0
    %v1171 = vadd.f32 %v1122, %v1170
    %v1172 = vpop.f32.mrf.mxu0
    %v1173 = vadd.f32 %v1124, %v1172
    %1174 = vdwg.mxu0
    %v1175 = vld [vmem:[%s2] sm:$0x1]
    %v1177 = vperm.slane %v1175, 0
    %v1179 = vadd.f32 %v1136, %v1177
    %v1180 = vadd.f32 %v1138, %v1177
    %v1181 = vadd.f32 %v1141, %v1177
    %v1182 = vadd.f32 %v1143, %v1177
    %v1183 = vadd.f32 %v1146, %v1177
    %v1184 = vadd.f32 %v1148, %v1177
    %v1185 = vadd.f32 %v1151, %v1177
    %v1186 = vadd.f32 %v1153, %v1177
    %v1187 = vadd.f32 %v1156, %v1177
    %v1188 = vadd.f32 %v1158, %v1177
    %v1189 = vadd.f32 %v1161, %v1177
    %v1190 = vadd.f32 %v1163, %v1177
    %v1191 = vadd.f32 %v1166, %v1177
    %v1192 = vadd.f32 %v1168, %v1177
    %v1193 = vadd.f32 %v1171, %v1177
    %v1194 = vadd.f32 %v1173, %v1177
    %v1195 = vmax.f32 %v1179, 0.0
    %v1196 = vmax.f32 %v1180, 0.0
    %v1197 = vmax.f32 %v1181, 0.0
    %v1198 = vmax.f32 %v1182, 0.0
    %v1199 = vmax.f32 %v1183, 0.0
    %v1200 = vmax.f32 %v1184, 0.0
    %v1201 = vmax.f32 %v1185, 0.0
    %v1202 = vmax.f32 %v1186, 0.0
    %v1203 = vmax.f32 %v1187, 0.0
    %v1204 = vmax.f32 %v1188, 0.0
    %v1205 = vmax.f32 %v1189, 0.0
    %v1206 = vmax.f32 %v1190, 0.0
    %v1207 = vmax.f32 %v1191, 0.0
    %v1208 = vmax.f32 %v1192, 0.0
    %v1209 = vmax.f32 %v1193, 0.0
    %v1210 = vmax.f32 %v1194, 0.0
    %v1211 = vpack.c.bf16 %v1195, %v1195
    %v1212 = vpack.c.bf16 %v1196, %v1196
    %v1213 = vpack.c.bf16 %v1197, %v1197
    %v1214 = vpack.c.bf16 %v1198, %v1198
    %v1215 = vpack.c.bf16 %v1199, %v1199
    %v1216 = vpack.c.bf16 %v1200, %v1200
    %v1217 = vpack.c.bf16 %v1201, %v1201
    %v1218 = vpack.c.bf16 %v1202, %v1202
    %v1219 = vpack.c.bf16 %v1203, %v1203
    %v1220 = vpack.c.bf16 %v1204, %v1204
    %v1221 = vpack.c.bf16 %v1205, %v1205
    %v1222 = vpack.c.bf16 %v1206, %v1206
    %v1223 = vpack.c.bf16 %v1207, %v1207
    %v1224 = vpack.c.bf16 %v1208, %v1208
    %v1225 = vpack.c.bf16 %v1209, %v1209
    %v1226 = vpack.c.bf16 %v1210, %v1210
    %v1243 = vunpack.c.l.b16 %v1211
    %v1244 = vunpack.c.l.b16 %v1212
    %v1245 = vunpack.c.l.b16 %v1213
    %v1246 = vunpack.c.l.b16 %v1214
    %v1247 = vunpack.c.l.b16 %v1215
    %v1248 = vunpack.c.l.b16 %v1216
    %v1249 = vunpack.c.l.b16 %v1217
    %v1250 = vunpack.c.l.b16 %v1218
    %v1251 = vunpack.c.l.b16 %v1219
    %v1252 = vunpack.c.l.b16 %v1220
    %v1253 = vunpack.c.l.b16 %v1221
    %v1254 = vunpack.c.l.b16 %v1222
    %v1255 = vunpack.c.l.b16 %v1223
    %v1256 = vunpack.c.l.b16 %v1224
    %v1257 = vunpack.c.l.b16 %v1225
    %v1258 = vunpack.c.l.b16 %v1226
    %v1259 = vpack.c.b16 %v1244, %v1243
    %v1260 = vpack.c.b16 %v1246, %v1245
    %v1261 = vpack.c.b16 %v1248, %v1247
    %v1262 = vpack.c.b16 %v1250, %v1249
    %v1263 = vpack.c.b16 %v1252, %v1251
    %v1264 = vpack.c.b16 %v1254, %v1253
    %v1265 = vpack.c.b16 %v1256, %v1255
    %v1266 = vpack.c.b16 %v1258, %v1257
    %v1275 = vsel %vm245, %v1259, 0
    %v1276 = vsel %vm252, %v1260, 0
    %v1277 = vsel %vm259, %v1261, 0
    %v1278 = vsel %vm266, %v1262, 0
    %v1279 = vsel %vm245, %v1263, 0
    %v1280 = vsel %vm252, %v1264, 0
    %v1281 = vsel %vm259, %v1265, 0
    %v1282 = vsel %vm266, %v1266, 0
    %v1283 = vsel %vm317, %v1259, 0
    %v1284 = vsel %vm324, %v1260, 0
    %v1285 = vsel %vm331, %v1261, 0
    %v1286 = vsel %vm338, %v1262, 0
    %v1287 = vsel %vm317, %v1263, 0
    %v1288 = vsel %vm324, %v1264, 0
    %v1289 = vsel %vm331, %v1265, 0
    %v1290 = vsel %vm338, %v1266, 0
    %v1292 = vshll.u32 %v1259, 16
    %v1294 = vrot.slane %v1292, 1
    %v1295 = vsel %vm347, %v354, %v1294
    %v1296 = vshrl.u32 %v1259, 16
    %v1298 = vor.u32 %v1296, %v1294
    %v1300 = vshll.u32 %v1260, 16
    %v1302 = vrot.slane %v1300, 1
    %v1303 = vsel %vm347, %v1298, %v1302
    %v1304 = vshrl.u32 %v1260, 16
    %v1306 = vor.u32 %v1304, %v1302
    %v1308 = vshll.u32 %v1261, 16
    %v1310 = vrot.slane %v1308, 1
    %v1311 = vsel %vm347, %v1306, %v1310
    %v1312 = vshrl.u32 %v1261, 16
    %v1314 = vor.u32 %v1312, %v1310
    %v1316 = vshll.u32 %v1262, 16
    %v1318 = vrot.slane %v1316, 1
    %v1319 = vsel %vm347, %v1314, %v1318
    %v1320 = vshrl.u32 %v1262, 16
    %v1322 = vor.u32 %v1320, %v1318
    %v1324 = vshll.u32 %v1263, 16
    %v1326 = vrot.slane %v1324, 1
    %v1327 = vsel %vm347, %v354, %v1326
    %v1328 = vshrl.u32 %v1263, 16
    %v1330 = vor.u32 %v1328, %v1326
    %v1332 = vshll.u32 %v1264, 16
    %v1334 = vrot.slane %v1332, 1
    %v1335 = vsel %vm347, %v1330, %v1334
    %v1336 = vshrl.u32 %v1264, 16
    %v1338 = vor.u32 %v1336, %v1334
    %v1340 = vshll.u32 %v1265, 16
    %v1342 = vrot.slane %v1340, 1
    %v1343 = vsel %vm347, %v1338, %v1342
    %v1344 = vshrl.u32 %v1265, 16
    %v1346 = vor.u32 %v1344, %v1342
    %v1348 = vshll.u32 %v1266, 16
    %v1350 = vrot.slane %v1348, 1
    %v1351 = vsel %vm347, %v1346, %v1350
    %v1352 = vshrl.u32 %v1266, 16
    %v1354 = vor.u32 %v1352, %v1350
    %1355 = vrot.lane.b32.xlu0 %v1295, 32
    %v1356 = vpop.permute.xlu0 %1355
    %1357 = vrot.lane.b32.xlu0 %v1303, 32
    %v1358 = vpop.permute.xlu0 %1357
    %1359 = vrot.lane.b32.xlu0 %v1311, 32
    %v1360 = vpop.permute.xlu0 %1359
    %1361 = vrot.lane.b32.xlu0 %v1319, 32
    %v1362 = vpop.permute.xlu0 %1361
    %1363 = vrot.lane.b32.xlu0 %v1322, 32
    %v1364 = vpop.permute.xlu0 %1363
    %1365 = vrot.lane.b32.xlu0 %v1327, 32
    %v1366 = vpop.permute.xlu0 %1365
    %1367 = vrot.lane.b32.xlu0 %v1335, 32
    %v1368 = vpop.permute.xlu0 %1367
    %1369 = vrot.lane.b32.xlu0 %v1343, 32
    %v1370 = vpop.permute.xlu0 %1369
    %1371 = vrot.lane.b32.xlu0 %v1351, 32
    %v1372 = vpop.permute.xlu0 %1371
    %1373 = vrot.lane.b32.xlu0 %v1354, 32
    %v1374 = vpop.permute.xlu0 %1373
    %v1383 = vrot.slane %v1283, 1
    %v1384 = vsel %vm448, %v449, %v1383
    %v1385 = vrot.slane %v1284, 1
    %v1386 = vsel %vm448, %v1383, %v1385
    %v1387 = vrot.slane %v1285, 1
    %v1388 = vsel %vm448, %v1385, %v1387
    %v1389 = vrot.slane %v1286, 1
    %v1390 = vsel %vm448, %v1387, %v1389
    %v1391 = vrot.slane %v1287, 1
    %v1392 = vsel %vm448, %v449, %v1391
    %v1393 = vrot.slane %v1288, 1
    %v1394 = vsel %vm448, %v1391, %v1393
    %v1395 = vrot.slane %v1289, 1
    %v1396 = vsel %vm448, %v1393, %v1395
    %v1397 = vrot.slane %v1290, 1
    %v1398 = vsel %vm448, %v1395, %v1397
    %1399 = vrot.lane.b32.xlu0 %v1384, 64
    %v1400 = vpop.permute.xlu0 %1399
    %1401 = vrot.lane.b32.xlu0 %v1386, 64
    %v1402 = vpop.permute.xlu0 %1401
    %1403 = vrot.lane.b32.xlu0 %v1388, 64
    %v1404 = vpop.permute.xlu0 %1403
    %1405 = vrot.lane.b32.xlu0 %v1390, 64
    %v1406 = vpop.permute.xlu0 %1405
    %1407 = vrot.lane.b32.xlu0 %v1389, 64
    %v1408 = vpop.permute.xlu0 %1407
    %1409 = vrot.lane.b32.xlu0 %v1392, 64
    %v1410 = vpop.permute.xlu0 %1409
    %1411 = vrot.lane.b32.xlu0 %v1394, 64
    %v1412 = vpop.permute.xlu0 %1411
    %1413 = vrot.lane.b32.xlu0 %v1396, 64
    %v1414 = vpop.permute.xlu0 %1413
    %1415 = vrot.lane.b32.xlu0 %v1398, 64
    %v1416 = vpop.permute.xlu0 %1415
    %1417 = vrot.lane.b32.xlu0 %v1397, 64
    %v1418 = vpop.permute.xlu0 %1417
    %v1427 = vrot.slane %v1275, 4
    %v1428 = vsel %vm494, %v495, %v1427
    %v1429 = vrot.slane %v1276, 4
    %v1430 = vsel %vm494, %v1427, %v1429
    %v1431 = vrot.slane %v1277, 4
    %v1432 = vsel %vm494, %v1429, %v1431
    %v1433 = vrot.slane %v1278, 4
    %v1434 = vsel %vm494, %v1431, %v1433
    %v1435 = vrot.slane %v1279, 4
    %v1436 = vsel %vm494, %v495, %v1435
    %v1437 = vrot.slane %v1280, 4
    %v1438 = vsel %vm494, %v1435, %v1437
    %v1439 = vrot.slane %v1281, 4
    %v1440 = vsel %vm494, %v1437, %v1439
    %v1441 = vrot.slane %v1282, 4
    %v1442 = vsel %vm494, %v1439, %v1441
    %1443 = vrot.lane.b32.xlu0 %v1428, 96
    %v1444 = vpop.permute.xlu0 %1443
    %1445 = vrot.lane.b32.xlu0 %v1430, 96
    %v1446 = vpop.permute.xlu0 %1445
    %1447 = vrot.lane.b32.xlu0 %v1432, 96
    %v1448 = vpop.permute.xlu0 %1447
    %1449 = vrot.lane.b32.xlu0 %v1434, 96
    %v1450 = vpop.permute.xlu0 %1449
    %1451 = vrot.lane.b32.xlu0 %v1433, 96
    %v1452 = vpop.permute.xlu0 %1451
    %1453 = vrot.lane.b32.xlu0 %v1436, 96
    %v1454 = vpop.permute.xlu0 %1453
    %1455 = vrot.lane.b32.xlu0 %v1438, 96
    %v1456 = vpop.permute.xlu0 %1455
    %1457 = vrot.lane.b32.xlu0 %v1440, 96
    %v1458 = vpop.permute.xlu0 %1457
    %1459 = vrot.lane.b32.xlu0 %v1442, 96
    %v1460 = vpop.permute.xlu0 %1459
    %1461 = vrot.lane.b32.xlu0 %v1441, 96
    %v1462 = vpop.permute.xlu0 %1461
    %v1463 = vrot.slane %v1296, 4
    %v1464 = vrot.slane %v1292, 5
    %v1465 = vor.u32 %v1463, %v1464
    %v1466 = vrot.slane %v1304, 4
    %v1467 = vrot.slane %v1300, 5
    %v1468 = vor.u32 %v1466, %v1467
    %v1469 = vsel %vm532, %v1465, %v1468
    %v1470 = vrot.slane %v1312, 4
    %v1471 = vrot.slane %v1308, 5
    %v1472 = vor.u32 %v1470, %v1471
    %v1473 = vsel %vm532, %v1468, %v1472
    %v1474 = vrot.slane %v1320, 4
    %v1475 = vrot.slane %v1316, 5
    %v1476 = vor.u32 %v1474, %v1475
    %v1477 = vsel %vm532, %v1472, %v1476
    %v1478 = vrot.slane %v1328, 4
    %v1479 = vrot.slane %v1324, 5
    %v1480 = vor.u32 %v1478, %v1479
    %v1481 = vrot.slane %v1336, 4
    %v1482 = vrot.slane %v1332, 5
    %v1483 = vor.u32 %v1481, %v1482
    %v1484 = vsel %vm532, %v1480, %v1483
    %v1485 = vrot.slane %v1344, 4
    %v1486 = vrot.slane %v1340, 5
    %v1487 = vor.u32 %v1485, %v1486
    %v1488 = vsel %vm532, %v1483, %v1487
    %v1489 = vrot.slane %v1352, 4
    %v1490 = vrot.slane %v1348, 5
    %v1491 = vor.u32 %v1489, %v1490
    %v1492 = vsel %vm532, %v1487, %v1491
    %v1493 = vrot.slane %v1283, 5
    %v1494 = vrot.slane %v1284, 5
    %v1495 = vsel %vm583, %v1493, %v1494
    %v1496 = vrot.slane %v1285, 5
    %v1497 = vsel %vm583, %v1494, %v1496
    %v1498 = vrot.slane %v1286, 5
    %v1499 = vsel %vm583, %v1496, %v1498
    %v1500 = vsel %vm583, %v1498, %v591
    %v1501 = vrot.slane %v1287, 5
    %v1502 = vrot.slane %v1288, 5
    %v1503 = vsel %vm583, %v1501, %v1502
    %v1504 = vrot.slane %v1289, 5
    %v1505 = vsel %vm583, %v1502, %v1504
    %v1506 = vrot.slane %v1290, 5
    %v1507 = vsel %vm583, %v1504, %v1506
    %v1508 = vsel %vm583, %v1506, %v591
    %1509 = vrot.lane.b32.xlu0 %v1493, 32
    %v1510 = vpop.permute.xlu0 %1509
    %1511 = vrot.lane.b32.xlu0 %v1495, 32
    %v1512 = vpop.permute.xlu0 %1511
    %1513 = vrot.lane.b32.xlu0 %v1497, 32
    %v1514 = vpop.permute.xlu0 %1513
    %1515 = vrot.lane.b32.xlu0 %v1499, 32
    %v1516 = vpop.permute.xlu0 %1515
    %1517 = vrot.lane.b32.xlu0 %v1500, 32
    %v1518 = vpop.permute.xlu0 %1517
    %1519 = vrot.lane.b32.xlu0 %v1501, 32
    %v1520 = vpop.permute.xlu0 %1519
    %1521 = vrot.lane.b32.xlu0 %v1503, 32
    %v1522 = vpop.permute.xlu0 %1521
    %1523 = vrot.lane.b32.xlu0 %v1505, 32
    %v1524 = vpop.permute.xlu0 %1523
    %1525 = vrot.lane.b32.xlu0 %v1507, 32
    %v1526 = vpop.permute.xlu0 %1525
    %1527 = vrot.lane.b32.xlu0 %v1508, 32
    %v1528 = vpop.permute.xlu0 %1527
    %1529 = vrot.lane.b32.xlu0 %v1275, 64
    %v1530 = vpop.permute.xlu0 %1529
    %1531 = vrot.lane.b32.xlu0 %v1276, 64
    %v1532 = vpop.permute.xlu0 %1531
    %1533 = vrot.lane.b32.xlu0 %v1277, 64
    %v1534 = vpop.permute.xlu0 %1533
    %1535 = vrot.lane.b32.xlu0 %v1278, 64
    %v1536 = vpop.permute.xlu0 %1535
    %1537 = vrot.lane.b32.xlu0 0, 64
    %v1538 = vpop.permute.xlu0 %1537
    %1539 = vrot.lane.b32.xlu0 %v1279, 64
    %v1540 = vpop.permute.xlu0 %1539
    %1541 = vrot.lane.b32.xlu0 %v1280, 64
    %v1542 = vpop.permute.xlu0 %1541
    %1543 = vrot.lane.b32.xlu0 %v1281, 64
    %v1544 = vpop.permute.xlu0 %1543
    %1545 = vrot.lane.b32.xlu0 %v1282, 64
    %v1546 = vpop.permute.xlu0 %1545
    %v1547 = vsel %vm347, %v1322, %v353
    %v1548 = vsel %vm347, %v1354, %v353
    %1549 = vrot.lane.b32.xlu0 %v1303, 96
    %v1550 = vpop.permute.xlu0 %1549
    %1551 = vrot.lane.b32.xlu0 %v1311, 96
    %v1552 = vpop.permute.xlu0 %1551
    %1553 = vrot.lane.b32.xlu0 %v1319, 96
    %v1554 = vpop.permute.xlu0 %1553
    %1555 = vrot.lane.b32.xlu0 %v1547, 96
    %v1556 = vpop.permute.xlu0 %1555
    %1557 = vrot.lane.b32.xlu0 %v354, 96
    %v1558 = vpop.permute.xlu0 %1557
    %1559 = vrot.lane.b32.xlu0 %v1335, 96
    %v1560 = vpop.permute.xlu0 %1559
    %1561 = vrot.lane.b32.xlu0 %v1343, 96
    %v1562 = vpop.permute.xlu0 %1561
    %1563 = vrot.lane.b32.xlu0 %v1351, 96
    %v1564 = vpop.permute.xlu0 %1563
    %1565 = vrot.lane.b32.xlu0 %v1548, 96
    %v1566 = vpop.permute.xlu0 %1565
    %v1567 = vsel %vm448, %v1389, %v449
    %v1568 = vsel %vm448, %v1397, %v449
    %v1570 = vsel %vm690, 0, %v1356
    %v1573 = vsel %vm690, %v1275, %v1358
    %v1576 = vsel %vm690, %v1276, %v1360
    %v1579 = vsel %vm690, %v1277, %v1362
    %v1582 = vsel %vm690, %v1278, %v1364
    %v1584 = vsel %vm690, 0, %v1366
    %v1587 = vsel %vm690, %v1279, %v1368
    %v1590 = vsel %vm690, %v1280, %v1370
    %v1593 = vsel %vm690, %v1281, %v1372
    %v1596 = vsel %vm690, %v1282, %v1374
    %v1598 = vsel %vm732, %v1570, %v1400
    %v1600 = vsel %vm732, %v1573, %v1402
    %v1602 = vsel %vm732, %v1576, %v1404
    %v1604 = vsel %vm732, %v1579, %v1406
    %v1606 = vsel %vm732, %v1582, %v1408
    %v1608 = vsel %vm732, %v1584, %v1410
    %v1610 = vsel %vm732, %v1587, %v1412
    %v1612 = vsel %vm732, %v1590, %v1414
    %v1614 = vsel %vm732, %v1593, %v1416
    %v1616 = vsel %vm732, %v1596, %v1418
    %v1618 = vsel %vm774, %v1598, %v1444
    %v1620 = vsel %vm774, %v1600, %v1446
    %v1622 = vsel %vm774, %v1602, %v1448
    %v1624 = vsel %vm774, %v1604, %v1450
    %v1626 = vsel %vm774, %v1606, %v1452
    %v1628 = vsel %vm774, %v1608, %v1454
    %v1630 = vsel %vm774, %v1610, %v1456
    %v1632 = vsel %vm774, %v1612, %v1458
    %v1634 = vsel %vm774, %v1614, %v1460
    %v1636 = vsel %vm774, %v1616, %v1462
    %v1639 = vsel %vm690, %v1465, %v1510
    %v1642 = vsel %vm690, %v1469, %v1512
    %v1645 = vsel %vm690, %v1473, %v1514
    %v1648 = vsel %vm690, %v1477, %v1516
    %v1651 = vsel %vm690, %v1476, %v1518
    %v1654 = vsel %vm690, %v1480, %v1520
    %v1657 = vsel %vm690, %v1484, %v1522
    %v1660 = vsel %vm690, %v1488, %v1524
    %v1663 = vsel %vm690, %v1492, %v1526
    %v1666 = vsel %vm690, %v1491, %v1528
    %v1668 = vsel %vm732, %v1639, %v1530
    %v1670 = vsel %vm732, %v1642, %v1532
    %v1672 = vsel %vm732, %v1645, %v1534
    %v1674 = vsel %vm732, %v1648, %v1536
    %v1676 = vsel %vm732, %v1651, %v1538
    %v1678 = vsel %vm732, %v1654, %v1540
    %v1680 = vsel %vm732, %v1657, %v1542
    %v1682 = vsel %vm732, %v1660, %v1544
    %v1684 = vsel %vm732, %v1663, %v1546
    %v1685 = vsel %vm732, %v1666, %v1538
    %v1687 = vsel %vm774, %v1668, %v1550
    %v1689 = vsel %vm774, %v1670, %v1552
    %v1691 = vsel %vm774, %v1672, %v1554
    %v1693 = vsel %vm774, %v1674, %v1556
    %v1695 = vsel %vm774, %v1676, %v1558
    %v1697 = vsel %vm774, %v1678, %v1560
    %v1699 = vsel %vm774, %v1680, %v1562
    %v1701 = vsel %vm774, %v1682, %v1564
    %v1703 = vsel %vm774, %v1684, %v1566
    %v1704 = vsel %vm774, %v1685, %v1558
    %v1705 = vshrl.u32 %v1618, 16
    %v1707 = vrot.slane %v1705, 3
    %v1708 = vshll.u32 %v1618, 16
    %v1710 = vrot.slane %v1708, 4
    %v1711 = vor.u32 %v1707, %v1710
    %v1712 = vshrl.u32 %v1620, 16
    %v1714 = vrot.slane %v1712, 3
    %v1715 = vshll.u32 %v1620, 16
    %v1717 = vrot.slane %v1715, 4
    %v1718 = vor.u32 %v1714, %v1717
    %v1719 = vsel %vm814, %v1711, %v1718
    %v1720 = vshrl.u32 %v1687, 16
    %v1722 = vrot.slane %v1720, 3
    %v1723 = vshll.u32 %v1687, 16
    %v1725 = vrot.slane %v1723, 4
    %v1726 = vor.u32 %v1722, %v1725
    %v1727 = vshrl.u32 %v1689, 16
    %v1729 = vrot.slane %v1727, 3
    %v1730 = vshll.u32 %v1689, 16
    %v1732 = vrot.slane %v1730, 4
    %v1733 = vor.u32 %v1729, %v1732
    %v1734 = vsel %vm814, %v1726, %v1733
    %v1736 = vshrl.u32 %v1386, 16
    %v1738 = vrot.slane %v1736, 3
    %v1739 = vshll.u32 %v1386, 16
    %v1741 = vrot.slane %v1739, 4
    %v1742 = vor.u32 %v1738, %v1741
    %v1744 = vshrl.u32 %v1388, 16
    %v1746 = vrot.slane %v1744, 3
    %v1747 = vshll.u32 %v1388, 16
    %v1749 = vrot.slane %v1747, 4
    %v1750 = vor.u32 %v1746, %v1749
    %v1751 = vsel %vm814, %v1742, %v1750
    %v1752 = vshrl.u32 %v1622, 16
    %v1754 = vrot.slane %v1752, 3
    %v1755 = vshll.u32 %v1622, 16
    %v1757 = vrot.slane %v1755, 4
    %v1758 = vor.u32 %v1754, %v1757
    %v1759 = vsel %vm814, %v1718, %v1758
    %v1760 = vshrl.u32 %v1691, 16
    %v1762 = vrot.slane %v1760, 3
    %v1763 = vshll.u32 %v1691, 16
    %v1765 = vrot.slane %v1763, 4
    %v1766 = vor.u32 %v1762, %v1765
    %v1767 = vsel %vm814, %v1733, %v1766
    %v1769 = vshrl.u32 %v1390, 16
    %v1771 = vrot.slane %v1769, 3
    %v1772 = vshll.u32 %v1390, 16
    %v1774 = vrot.slane %v1772, 4
    %v1775 = vor.u32 %v1771, %v1774
    %v1776 = vsel %vm814, %v1750, %v1775
    %v1777 = vshrl.u32 %v1624, 16
    %v1779 = vrot.slane %v1777, 3
    %v1780 = vshll.u32 %v1624, 16
    %v1782 = vrot.slane %v1780, 4
    %v1783 = vor.u32 %v1779, %v1782
    %v1784 = vsel %vm814, %v1758, %v1783
    %v1785 = vshrl.u32 %v1693, 16
    %v1787 = vrot.slane %v1785, 3
    %v1788 = vshll.u32 %v1693, 16
    %v1790 = vrot.slane %v1788, 4
    %v1791 = vor.u32 %v1787, %v1790
    %v1792 = vsel %vm814, %v1766, %v1791
    %v1794 = vshrl.u32 %v1567, 16
    %v1796 = vrot.slane %v1794, 3
    %v1797 = vshll.u32 %v1567, 16
    %v1799 = vrot.slane %v1797, 4
    %v1800 = vor.u32 %v1796, %v1799
    %v1801 = vsel %vm814, %v1775, %v1800
    %v1802 = vshrl.u32 %v1626, 16
    %v1804 = vrot.slane %v1802, 3
    %v1805 = vshll.u32 %v1626, 16
    %v1807 = vrot.slane %v1805, 4
    %v1808 = vor.u32 %v1804, %v1807
    %v1809 = vsel %vm814, %v1783, %v1808
    %v1810 = vshrl.u32 %v1695, 16
    %v1812 = vrot.slane %v1810, 3
    %v1813 = vshll.u32 %v1695, 16
    %v1815 = vrot.slane %v1813, 4
    %v1816 = vor.u32 %v1812, %v1815
    %v1817 = vsel %vm814, %v1791, %v1816
    %v1818 = vsel %vm814, %v1800, %v896
    %v1819 = vshrl.u32 %v1628, 16
    %v1821 = vrot.slane %v1819, 3
    %v1822 = vshll.u32 %v1628, 16
    %v1824 = vrot.slane %v1822, 4
    %v1825 = vor.u32 %v1821, %v1824
    %v1826 = vshrl.u32 %v1630, 16
    %v1828 = vrot.slane %v1826, 3
    %v1829 = vshll.u32 %v1630, 16
    %v1831 = vrot.slane %v1829, 4
    %v1832 = vor.u32 %v1828, %v1831
    %v1833 = vsel %vm814, %v1825, %v1832
    %v1834 = vshrl.u32 %v1697, 16
    %v1836 = vrot.slane %v1834, 3
    %v1837 = vshll.u32 %v1697, 16
    %v1839 = vrot.slane %v1837, 4
    %v1840 = vor.u32 %v1836, %v1839
    %v1841 = vshrl.u32 %v1699, 16
    %v1843 = vrot.slane %v1841, 3
    %v1844 = vshll.u32 %v1699, 16
    %v1846 = vrot.slane %v1844, 4
    %v1847 = vor.u32 %v1843, %v1846
    %v1848 = vsel %vm814, %v1840, %v1847
    %v1850 = vshrl.u32 %v1394, 16
    %v1852 = vrot.slane %v1850, 3
    %v1853 = vshll.u32 %v1394, 16
    %v1855 = vrot.slane %v1853, 4
    %v1856 = vor.u32 %v1852, %v1855
    %v1858 = vshrl.u32 %v1396, 16
    %v1860 = vrot.slane %v1858, 3
    %v1861 = vshll.u32 %v1396, 16
    %v1863 = vrot.slane %v1861, 4
    %v1864 = vor.u32 %v1860, %v1863
    %v1865 = vsel %vm814, %v1856, %v1864
    %v1866 = vshrl.u32 %v1632, 16
    %v1868 = vrot.slane %v1866, 3
    %v1869 = vshll.u32 %v1632, 16
    %v1871 = vrot.slane %v1869, 4
    %v1872 = vor.u32 %v1868, %v1871
    %v1873 = vsel %vm814, %v1832, %v1872
    %v1874 = vshrl.u32 %v1701, 16
    %v1876 = vrot.slane %v1874, 3
    %v1877 = vshll.u32 %v1701, 16
    %v1879 = vrot.slane %v1877, 4
    %v1880 = vor.u32 %v1876, %v1879
    %v1881 = vsel %vm814, %v1847, %v1880
    %v1883 = vshrl.u32 %v1398, 16
    %v1885 = vrot.slane %v1883, 3
    %v1886 = vshll.u32 %v1398, 16
    %v1888 = vrot.slane %v1886, 4
    %v1889 = vor.u32 %v1885, %v1888
    %v1890 = vsel %vm814, %v1864, %v1889
    %v1891 = vshrl.u32 %v1634, 16
    %v1893 = vrot.slane %v1891, 3
    %v1894 = vshll.u32 %v1634, 16
    %v1896 = vrot.slane %v1894, 4
    %v1897 = vor.u32 %v1893, %v1896
    %v1898 = vsel %vm814, %v1872, %v1897
    %v1899 = vshrl.u32 %v1703, 16
    %v1901 = vrot.slane %v1899, 3
    %v1902 = vshll.u32 %v1703, 16
    %v1904 = vrot.slane %v1902, 4
    %v1905 = vor.u32 %v1901, %v1904
    %v1906 = vsel %vm814, %v1880, %v1905
    %v1908 = vshrl.u32 %v1568, 16
    %v1910 = vrot.slane %v1908, 3
    %v1911 = vshll.u32 %v1568, 16
    %v1913 = vrot.slane %v1911, 4
    %v1914 = vor.u32 %v1910, %v1913
    %v1915 = vsel %vm814, %v1889, %v1914
    %v1916 = vshrl.u32 %v1636, 16
    %v1918 = vrot.slane %v1916, 3
    %v1919 = vshll.u32 %v1636, 16
    %v1921 = vrot.slane %v1919, 4
    %v1922 = vor.u32 %v1918, %v1921
    %v1923 = vsel %vm814, %v1897, %v1922
    %v1924 = vshrl.u32 %v1704, 16
    %v1926 = vrot.slane %v1924, 3
    %v1927 = vshll.u32 %v1704, 16
    %v1929 = vrot.slane %v1927, 4
    %v1930 = vor.u32 %v1926, %v1929
    %v1931 = vsel %vm814, %v1905, %v1930
    %v1932 = vsel %vm814, %v1914, %v896
    %v1949 = vld [vmem:[%s4] sm:$0xf]
    %v1950 = vld [vmem:[%s4 + $0x4] sm:$0xf]
    %v1951 = vld [vmem:[%s4 + $0x8] sm:$0xf]
    %v1952 = vld [vmem:[%s4 + $0xc] sm:$0xf]
    %v1953 = vld [vmem:[%s4 + $0x10] sm:$0xf]
    %v1954 = vld [vmem:[%s4 + $0x14] sm:$0xf]
    %v1955 = vld [vmem:[%s4 + $0x18] sm:$0xf]
    %v1956 = vld [vmem:[%s4 + $0x1c] sm:$0xf]
    %v1957 = vld [vmem:[%s4 + $0x20] sm:$0xf]
    %v1958 = vld [vmem:[%s4 + $0x24] sm:$0xf]
    %v1959 = vld [vmem:[%s4 + $0x28] sm:$0xf]
    %v1960 = vld [vmem:[%s4 + $0x2c] sm:$0xf]
    %v1961 = vld [vmem:[%s4 + $0x30] sm:$0xf]
    %v1962 = vld [vmem:[%s4 + $0x34] sm:$0xf]
    %v1963 = vld [vmem:[%s4 + $0x38] sm:$0xf]
    %v1964 = vld [vmem:[%s4 + $0x3c] sm:$0xf]
    %v1965 = vld [vmem:[%s4 + $0x40] sm:$0xf]
    %v1966 = vld [vmem:[%s4 + $0x44] sm:$0xf]
    %v1967 = vld [vmem:[%s4 + $0x48] sm:$0xf]
    %v1968 = vld [vmem:[%s4 + $0x4c] sm:$0xf]
    %v1969 = vld [vmem:[%s4 + $0x50] sm:$0xf]
    %v1970 = vld [vmem:[%s4 + $0x54] sm:$0xf]
    %v1971 = vld [vmem:[%s4 + $0x58] sm:$0xf]
    %v1972 = vld [vmem:[%s4 + $0x5c] sm:$0xf]
    %v1973 = vld [vmem:[%s4 + $0x60] sm:$0xf]
    %v1974 = vld [vmem:[%s4 + $0x64] sm:$0xf]
    %v1975 = vld [vmem:[%s4 + $0x68] sm:$0xf]
    %v1976 = vld [vmem:[%s4 + $0x6c] sm:$0xf]
    %v1977 = vld [vmem:[%s4 + $0x70] sm:$0xf]
    %v1978 = vld [vmem:[%s4 + $0x74] sm:$0xf]
    %v1979 = vld [vmem:[%s4 + $0x78] sm:$0xf]
    %v1980 = vld [vmem:[%s4 + $0x7c] sm:$0xf]
    %v1981 = vld [vmem:[%s4 + $0x80] sm:$0xf]
    %v1982 = vld [vmem:[%s4 + $0x84] sm:$0xf]
    %v1983 = vld [vmem:[%s4 + $0x88] sm:$0xf]
    %v1984 = vld [vmem:[%s4 + $0x8c] sm:$0xf]
    %v1985 = vld [vmem:[%s5] sm:$0x1]
    %v1987 = vperm.slane %v1985, 0
    %v2025 = vunpack.c.l.b16 %v1949
    %v2026 = vunpack.c.l.b16 %v1950
    %v2027 = vunpack.c.l.b16 %v1951
    %v2028 = vunpack.c.l.b16 %v1952
    %v2029 = vunpack.c.l.b16 %v1953
    %v2030 = vunpack.c.l.b16 %v1954
    %v2031 = vunpack.c.l.b16 %v1955
    %v2032 = vunpack.c.l.b16 %v1956
    %v2033 = vunpack.c.l.b16 %v1957
    %v2034 = vunpack.c.l.b16 %v1958
    %v2035 = vunpack.c.l.b16 %v1959
    %v2036 = vunpack.c.l.b16 %v1960
    %v2037 = vunpack.c.l.b16 %v1961
    %v2038 = vunpack.c.l.b16 %v1962
    %v2039 = vunpack.c.l.b16 %v1963
    %v2040 = vunpack.c.l.b16 %v1964
    %v2041 = vunpack.c.l.b16 %v1965
    %v2042 = vunpack.c.l.b16 %v1966
    %v2043 = vunpack.c.l.b16 %v1967
    %v2044 = vunpack.c.l.b16 %v1968
    %v2045 = vunpack.c.l.b16 %v1969
    %v2046 = vunpack.c.l.b16 %v1970
    %v2047 = vunpack.c.l.b16 %v1971
    %v2048 = vunpack.c.l.b16 %v1972
    %v2049 = vunpack.c.l.b16 %v1973
    %v2050 = vunpack.c.l.b16 %v1974
    %v2051 = vunpack.c.l.b16 %v1975
    %v2052 = vunpack.c.l.b16 %v1976
    %v2053 = vunpack.c.l.b16 %v1977
    %v2054 = vunpack.c.l.b16 %v1978
    %v2055 = vunpack.c.l.b16 %v1979
    %v2056 = vunpack.c.l.b16 %v1980
    %v2057 = vunpack.c.l.b16 %v1981
    %v2058 = vunpack.c.l.b16 %v1982
    %v2059 = vunpack.c.l.b16 %v1983
    %v2060 = vunpack.c.l.b16 %v1984
    %v2061 = vpack.c.b16 %v2026, %v2025
    %v2062 = vpack.c.b16 %v2028, %v2027
    %v2063 = vpack.c.b16 %v2030, %v2029
    %v2064 = vpack.c.b16 %v2032, %v2031
    %v2065 = vpack.c.b16 %v2034, %v2033
    %v2066 = vpack.c.b16 %v2036, %v2035
    %v2067 = vpack.c.b16 %v2038, %v2037
    %v2068 = vpack.c.b16 %v2040, %v2039
    %v2069 = vpack.c.b16 %v2042, %v2041
    %v2070 = vpack.c.b16 %v2044, %v2043
    %v2071 = vpack.c.b16 %v2046, %v2045
    %v2072 = vpack.c.b16 %v2048, %v2047
    %v2073 = vpack.c.b16 %v2050, %v2049
    %v2074 = vpack.c.b16 %v2052, %v2051
    %v2075 = vpack.c.b16 %v2054, %v2053
    %v2076 = vpack.c.b16 %v2056, %v2055
    %v2077 = vpack.c.b16 %v2058, %v2057
    %v2078 = vpack.c.b16 %v2060, %v2059
    %v2098 = vsel %vm690, %v1751, 0
    %v2101 = vsel %vm690, %v1776, 0
    %v2104 = vsel %vm690, %v1801, 0
    %v2107 = vsel %vm690, %v1818, 0
    %v2110 = vsel %vm690, %v1865, 0
    %v2113 = vsel %vm690, %v1890, 0
    %v2116 = vsel %vm690, %v1915, 0
    %v2119 = vsel %vm690, %v1932, 0
    %2121 = vmatpush.bf16.msra.mxu0 %v2068
    %2122 = vmatpush.bf16.msra.mxu0 %v2067
    %2123 = vmatpush.bf16.msra.mxu0 %v2066
    %2124 = vmatpush.bf16.msra.mxu0 %v2065
    %2125 = vmatpush.bf16.msra.mxu0 %v2064
    %2126 = vmatpush.bf16.msra.mxu0 %v2063
    %2127 = vmatpush.bf16.msra.mxu0 %v2062
    %2128 = vmatpush.bf16.msra.mxu0 %v2061
    %2129 = vmatmul.bf16.gmra.mxu0 %v1719
    %v2130 = vpop.f32.mrf.mxu0
    %v2131 = vadd.f32 %v1987, %v2130
    %v2132 = vpop.f32.mrf.mxu0
    %v2133 = vadd.f32 %v1987, %v2132
    %2134 = vmatmul.bf16.gmra.mxu0 %v1759
    %v2135 = vpop.f32.mrf.mxu0
    %v2136 = vadd.f32 %v1987, %v2135
    %v2137 = vpop.f32.mrf.mxu0
    %v2138 = vadd.f32 %v1987, %v2137
    %2139 = vmatmul.bf16.gmra.mxu0 %v1784
    %v2140 = vpop.f32.mrf.mxu0
    %v2141 = vadd.f32 %v1987, %v2140
    %v2142 = vpop.f32.mrf.mxu0
    %v2143 = vadd.f32 %v1987, %v2142
    %2144 = vmatmul.bf16.gmra.mxu0 %v1809
    %v2145 = vpop.f32.mrf.mxu0
    %v2146 = vadd.f32 %v1987, %v2145
    %v2147 = vpop.f32.mrf.mxu0
    %v2148 = vadd.f32 %v1987, %v2147
    %2149 = vmatmul.bf16.gmra.mxu0 %v1833
    %v2150 = vpop.f32.mrf.mxu0
    %v2151 = vadd.f32 %v1987, %v2150
    %v2152 = vpop.f32.mrf.mxu0
    %v2153 = vadd.f32 %v1987, %v2152
    %2154 = vmatmul.bf16.gmra.mxu0 %v1873
    %v2155 = vpop.f32.mrf.mxu0
    %v2156 = vadd.f32 %v1987, %v2155
    %v2157 = vpop.f32.mrf.mxu0
    %v2158 = vadd.f32 %v1987, %v2157
    %2159 = vmatmul.bf16.gmra.mxu0 %v1898
    %v2160 = vpop.f32.mrf.mxu0
    %v2161 = vadd.f32 %v1987, %v2160
    %v2162 = vpop.f32.mrf.mxu0
    %v2163 = vadd.f32 %v1987, %v2162
    %2164 = vmatmul.bf16.gmra.mxu0 %v1923
    %v2165 = vpop.f32.mrf.mxu0
    %v2166 = vadd.f32 %v1987, %v2165
    %v2167 = vpop.f32.mrf.mxu0
    %v2168 = vadd.f32 %v1987, %v2167
    %2169 = vdwg.mxu0
    %2170 = vmatpush.bf16.msra.mxu0 %v2076
    %2171 = vmatpush.bf16.msra.mxu0 %v2075
    %2172 = vmatpush.bf16.msra.mxu0 %v2074
    %2173 = vmatpush.bf16.msra.mxu0 %v2073
    %2174 = vmatpush.bf16.msra.mxu0 %v2072
    %2175 = vmatpush.bf16.msra.mxu0 %v2071
    %2176 = vmatpush.bf16.msra.mxu0 %v2070
    %2177 = vmatpush.bf16.msra.mxu0 %v2069
    %2178 = vmatmul.bf16.gmra.mxu0 %v1734
    %v2179 = vpop.f32.mrf.mxu0
    %v2180 = vadd.f32 %v2131, %v2179
    %v2181 = vpop.f32.mrf.mxu0
    %v2182 = vadd.f32 %v2133, %v2181
    %2183 = vmatmul.bf16.gmra.mxu0 %v1767
    %v2184 = vpop.f32.mrf.mxu0
    %v2185 = vadd.f32 %v2136, %v2184
    %v2186 = vpop.f32.mrf.mxu0
    %v2187 = vadd.f32 %v2138, %v2186
    %2188 = vmatmul.bf16.gmra.mxu0 %v1792
    %v2189 = vpop.f32.mrf.mxu0
    %v2190 = vadd.f32 %v2141, %v2189
    %v2191 = vpop.f32.mrf.mxu0
    %v2192 = vadd.f32 %v2143, %v2191
    %2193 = vmatmul.bf16.gmra.mxu0 %v1817
    %v2194 = vpop.f32.mrf.mxu0
    %v2195 = vadd.f32 %v2146, %v2194
    %v2196 = vpop.f32.mrf.mxu0
    %v2197 = vadd.f32 %v2148, %v2196
    %2198 = vmatmul.bf16.gmra.mxu0 %v1848
    %v2199 = vpop.f32.mrf.mxu0
    %v2200 = vadd.f32 %v2151, %v2199
    %v2201 = vpop.f32.mrf.mxu0
    %v2202 = vadd.f32 %v2153, %v2201
    %2203 = vmatmul.bf16.gmra.mxu0 %v1881
    %v2204 = vpop.f32.mrf.mxu0
    %v2205 = vadd.f32 %v2156, %v2204
    %v2206 = vpop.f32.mrf.mxu0
    %v2207 = vadd.f32 %v2158, %v2206
    %2208 = vmatmul.bf16.gmra.mxu0 %v1906
    %v2209 = vpop.f32.mrf.mxu0
    %v2210 = vadd.f32 %v2161, %v2209
    %v2211 = vpop.f32.mrf.mxu0
    %v2212 = vadd.f32 %v2163, %v2211
    %2213 = vmatmul.bf16.gmra.mxu0 %v1931
    %v2214 = vpop.f32.mrf.mxu0
    %v2215 = vadd.f32 %v2166, %v2214
    %v2216 = vpop.f32.mrf.mxu0
    %v2217 = vadd.f32 %v2168, %v2216
    %2218 = vdwg.mxu0
    %2219 = vmatpush.bf16.msra.mxu0 0
    %2220 = vmatpush.bf16.msra.mxu0 0
    %2221 = vmatpush.bf16.msra.mxu0 0
    %2222 = vmatpush.bf16.msra.mxu0 0
    %2223 = vmatpush.bf16.msra.mxu0 0
    %2224 = vmatpush.bf16.msra.mxu0 0
    %2225 = vmatpush.bf16.msra.mxu0 %v2078
    %2226 = vmatpush.bf16.msra.mxu0 %v2077
    %2227 = vmatmul.bf16.gmra.mxu0 %v2098
    %v2228 = vpop.f32.mrf.mxu0
    %v2229 = vadd.f32 %v2180, %v2228
    %v2230 = vpop.f32.mrf.mxu0
    %v2231 = vadd.f32 %v2182, %v2230
    %2232 = vmatmul.bf16.gmra.mxu0 %v2101
    %v2233 = vpop.f32.mrf.mxu0
    %v2234 = vadd.f32 %v2185, %v2233
    %v2235 = vpop.f32.mrf.mxu0
    %v2236 = vadd.f32 %v2187, %v2235
    %2237 = vmatmul.bf16.gmra.mxu0 %v2104
    %v2238 = vpop.f32.mrf.mxu0
    %v2239 = vadd.f32 %v2190, %v2238
    %v2240 = vpop.f32.mrf.mxu0
    %v2241 = vadd.f32 %v2192, %v2240
    %2242 = vmatmul.bf16.gmra.mxu0 %v2107
    %v2243 = vpop.f32.mrf.mxu0
    %v2244 = vadd.f32 %v2195, %v2243
    %v2245 = vpop.f32.mrf.mxu0
    %v2246 = vadd.f32 %v2197, %v2245
    %2247 = vmatmul.bf16.gmra.mxu0 %v2110
    %v2248 = vpop.f32.mrf.mxu0
    %v2249 = vadd.f32 %v2200, %v2248
    %v2250 = vpop.f32.mrf.mxu0
    %v2251 = vadd.f32 %v2202, %v2250
    %2252 = vmatmul.bf16.gmra.mxu0 %v2113
    %v2253 = vpop.f32.mrf.mxu0
    %v2254 = vadd.f32 %v2205, %v2253
    %v2255 = vpop.f32.mrf.mxu0
    %v2256 = vadd.f32 %v2207, %v2255
    %2257 = vmatmul.bf16.gmra.mxu0 %v2116
    %v2258 = vpop.f32.mrf.mxu0
    %v2259 = vadd.f32 %v2210, %v2258
    %v2260 = vpop.f32.mrf.mxu0
    %v2261 = vadd.f32 %v2212, %v2260
    %2262 = vmatmul.bf16.gmra.mxu0 %v2119
    %v2263 = vpop.f32.mrf.mxu0
    %v2264 = vadd.f32 %v2215, %v2263
    %v2265 = vpop.f32.mrf.mxu0
    %v2266 = vadd.f32 %v2217, %v2265
    %2267 = vdwg.mxu0
    %v2268 = vsel %vm690, %v2229, 0.0
    %v2269 = vsel %vm690, %v2231, 0.0
    %v2270 = vadd.f32 %v2268, %v2269
    %v2271 = vsel %vm690, %v2234, 0.0
    %v2272 = vadd.f32 %v2270, %v2271
    %v2273 = vsel %vm690, %v2236, 0.0
    %v2274 = vadd.f32 %v2272, %v2273
    %v2275 = vsel %vm690, %v2239, 0.0
    %v2276 = vadd.f32 %v2274, %v2275
    %v2277 = vsel %vm690, %v2241, 0.0
    %v2278 = vadd.f32 %v2276, %v2277
    %v2279 = vsel %vm690, %v2244, 0.0
    %v2280 = vadd.f32 %v2278, %v2279
    %v2281 = vsel %vm690, %v2246, 0.0
    %v2282 = vadd.f32 %v2280, %v2281
    %v2283 = vrot.slane %v2282, 4
    %v2284 = vadd.f32 %v2282, %v2283
    %v2285 = vrot.slane %v2284, 2
    %v2286 = vadd.f32 %v2284, %v2285
    %v2287 = vrot.slane %v2286, 1
    %v2288 = vadd.f32 %v2286, %v2287
    %v2289 = vsel %vm690, %v2249, 0.0
    %v2290 = vsel %vm690, %v2251, 0.0
    %v2291 = vadd.f32 %v2289, %v2290
    %v2292 = vsel %vm690, %v2254, 0.0
    %v2293 = vadd.f32 %v2291, %v2292
    %v2294 = vsel %vm690, %v2256, 0.0
    %v2295 = vadd.f32 %v2293, %v2294
    %v2296 = vsel %vm690, %v2259, 0.0
    %v2297 = vadd.f32 %v2295, %v2296
    %v2298 = vsel %vm690, %v2261, 0.0
    %v2299 = vadd.f32 %v2297, %v2298
    %v2300 = vsel %vm690, %v2264, 0.0
    %v2301 = vadd.f32 %v2299, %v2300
    %v2302 = vsel %vm690, %v2266, 0.0
    %v2303 = vadd.f32 %v2301, %v2302
    %v2304 = vrot.slane %v2303, 4
    %v2305 = vadd.f32 %v2303, %v2304
    %v2306 = vrot.slane %v2305, 2
    %v2307 = vadd.f32 %v2305, %v2306
    %v2308 = vrot.slane %v2307, 1
    %v2309 = vadd.f32 %v2307, %v2308
    %v2310 = vrcp.pop 64.0
    %v2311 = vmul.f32 64.0, %v2310
    %v2312 = vsub.f32 1.0, %v2311
    %v2313 = vmul.f32 %v2310, %v2312
    %v2314 = vadd.f32 %v2310, %v2313
    %vm2315 = vweird.f32 %v2310
    %v2316 = vsel %vm2315, %v2310, %v2314
    %v2317 = vmul.f32 %v2288, %v2316
    %v2318 = vmul.f32 %v2309, %v2316
    %v2319 = vld [vmem:[%s6] sm:$0xff]
    %v2320 = vld [vmem:[%s6 + $0x8] sm:$0xff]
    %v2321 = vld [vmem:[%s6 + $0x10] sm:$0xff]
    %v2322 = vld [vmem:[%s6 + $0x18] sm:$0xff]
    %vm2325 = vcmask 1041409
    %v2326 = vsel %vm2325, %v2318, %v2317
    %v2327 = vsel %vm690, %v2326, 0
    %2329 = vmatpush.msra.mxu0 0.0
    %2330 = vmatpush.msra.mxu0 0.0
    %2331 = vmatpush.msra.mxu0 0.0
    %2332 = vmatpush.msra.mxu0 0.0
    %2333 = vmatpush.msra.mxu0 0.0
    %2334 = vmatpush.msra.mxu0 0.0
    %2335 = vmatpush.msra.mxu0 0.0
    %2336 = vmatpush.msra.mxu0 0.0
    %2337 = vmatpush.msra.mxu0 0.0
    %2338 = vmatpush.msra.mxu0 0.0
    %2339 = vmatpush.msra.mxu0 0.0
    %2340 = vmatpush.msra.mxu0 0.0
    %2341 = vmatpush.msra.mxu0 %v2322
    %2342 = vmatpush.msra.mxu0 %v2321
    %2343 = vmatpush.msra.mxu0 %v2320
    %2344 = vmatpush.msra.mxu0 %v2319
    %2345 = vmatmul.f32.gmra.mxu0 %v2327
    %v2346 = vpop.f32.mrf.mxu0
    %v2347 = vadd.f32 0.0, %v2346
    %2348 = vdwg.mxu0
    %v2349 = vmax.f32 %v2347, 0.0
    %v2350 = vld [vmem:[%s7] sm:$0x3]
    %vm2351 = vcmask 15360
    %v2353 = vsel %vm2351, %v2349, 0
    %vm2355 = vcmask 1041408
    %v2357 = vsel %vm2355, %v2350, 0
    %2359 = vmatpush.msra.mxu0 0.0
    %2360 = vmatpush.msra.mxu0 0.0
    %2361 = vmatpush.msra.mxu0 0.0
    %2362 = vmatpush.msra.mxu0 0.0
    %2363 = vmatpush.msra.mxu0 0.0
    %2364 = vmatpush.msra.mxu0 0.0
    %2365 = vmatpush.msra.mxu0 0.0
    %2366 = vmatpush.msra.mxu0 0.0
    %2367 = vmatpush.msra.mxu0 0.0
    %2368 = vmatpush.msra.mxu0 0.0
    %2369 = vmatpush.msra.mxu0 0.0
    %2370 = vmatpush.msra.mxu0 0.0
    %2371 = vmatpush.msra.mxu0 0.0
    %2372 = vmatpush.msra.mxu0 0.0
    %2373 = vmatpush.msra.mxu0 0.0
    %2374 = vmatpush.msra.mxu0 %v2357
    %2375 = vmatmul.f32.gmra.mxu0 %v2353
    %v2376 = vpop.f32.mrf.mxu0
    %v2377 = vadd.f32 0.0, %v2376
    %2378 = vdwg.mxu0
    %v2379 = vxor.u32 %v2377, 2147483648
    %v2380 = vmul.f32 %v2379, 1.442695
    %v2381 = vpow.pop %v2380
    %v2382 = vadd.f32 %v2381, 1.0
    %v2383 = vrcp.pop %v2382
    %v2384 = vmul.f32 %v2382, %v2383
    %v2385 = vsub.f32 1.0, %v2384
    %v2386 = vmul.f32 %v2383, %v2385
    %v2387 = vadd.f32 %v2383, %v2386
    %vm2388 = vweird.f32 %v2382
    %vm2389 = vweird.f32 %v2383
    %vm2390 = vmor %vm2388, %vm2389
    %v2391 = vsel %vm2390, %v2383, %v2387
    %v2392 = vand.u32 2147483647, %v2382
    %vm2393 = vcmp.eq.f32.partialorder %v2392, 8.507059e+37
    %v2394 = vand.u32 %v2382, 2147483648
    %v2395 = vor.u32 1.1754944e-38, %v2394
    %v2396 = vsel %vm2393, %v2395, %v2391
    %v2397 = vmul.f32 1.0, %v2396
    %v2399 = vrot.slane %v2397, 1
    %v2400 = vperm.slane %v2397, 0
    %v2401 = vperm.slane %v2399, 0
    %v2404 = vmul.f32 %v2229, %v2400
    %v2405 = vmul.f32 %v2231, %v2400
    %v2406 = vmul.f32 %v2234, %v2400
    %v2407 = vmul.f32 %v2236, %v2400
    %v2408 = vmul.f32 %v2239, %v2400
    %v2409 = vmul.f32 %v2241, %v2400
    %v2410 = vmul.f32 %v2244, %v2400
    %v2411 = vmul.f32 %v2246, %v2400
    %v2412 = vmul.f32 %v2249, %v2401
    %v2413 = vmul.f32 %v2251, %v2401
    %v2414 = vmul.f32 %v2254, %v2401
    %v2415 = vmul.f32 %v2256, %v2401
    %v2416 = vmul.f32 %v2259, %v2401
    %v2417 = vmul.f32 %v2261, %v2401
    %v2418 = vmul.f32 %v2264, %v2401
    %v2419 = vmul.f32 %v2266, %v2401
    %2436 = vrot.lane.b32.xlu0 %v1179, 96
    %v2437 = vpop.permute.xlu0 %2436
    %2438 = vrot.lane.b32.xlu0 %v1180, 96
    %v2439 = vpop.permute.xlu0 %2438
    %2440 = vrot.lane.b32.xlu0 %v1181, 96
    %v2441 = vpop.permute.xlu0 %2440
    %2442 = vrot.lane.b32.xlu0 %v1182, 96
    %v2443 = vpop.permute.xlu0 %2442
    %2444 = vrot.lane.b32.xlu0 %v1183, 96
    %v2445 = vpop.permute.xlu0 %2444
    %2446 = vrot.lane.b32.xlu0 %v1184, 96
    %v2447 = vpop.permute.xlu0 %2446
    %2448 = vrot.lane.b32.xlu0 %v1185, 96
    %v2449 = vpop.permute.xlu0 %2448
    %2450 = vrot.lane.b32.xlu0 %v1186, 96
    %v2451 = vpop.permute.xlu0 %2450
    %2452 = vrot.lane.b32.xlu0 %v1187, 96
    %v2453 = vpop.permute.xlu0 %2452
    %2454 = vrot.lane.b32.xlu0 %v1188, 96
    %v2455 = vpop.permute.xlu0 %2454
    %2456 = vrot.lane.b32.xlu0 %v1189, 96
    %v2457 = vpop.permute.xlu0 %2456
    %2458 = vrot.lane.b32.xlu0 %v1190, 96
    %v2459 = vpop.permute.xlu0 %2458
    %2460 = vrot.lane.b32.xlu0 %v1191, 96
    %v2461 = vpop.permute.xlu0 %2460
    %2462 = vrot.lane.b32.xlu0 %v1192, 96
    %v2463 = vpop.permute.xlu0 %2462
    %2464 = vrot.lane.b32.xlu0 %v1193, 96
    %v2465 = vpop.permute.xlu0 %2464
    %2466 = vrot.lane.b32.xlu0 %v1194, 96
    %v2467 = vpop.permute.xlu0 %2466
    %v2484 = vadd.f32 %v2404, %v2437
    %v2485 = vadd.f32 %v2405, %v2439
    %v2486 = vadd.f32 %v2406, %v2441
    %v2487 = vadd.f32 %v2407, %v2443
    %v2488 = vadd.f32 %v2408, %v2445
    %v2489 = vadd.f32 %v2409, %v2447
    %v2490 = vadd.f32 %v2410, %v2449
    %v2491 = vadd.f32 %v2411, %v2451
    %v2492 = vadd.f32 %v2412, %v2453
    %v2493 = vadd.f32 %v2413, %v2455
    %v2494 = vadd.f32 %v2414, %v2457
    %v2495 = vadd.f32 %v2415, %v2459
    %v2496 = vadd.f32 %v2416, %v2461
    %v2497 = vadd.f32 %v2417, %v2463
    %v2498 = vadd.f32 %v2418, %v2465
    %v2499 = vadd.f32 %v2419, %v2467
    %v2500 = vmax.f32 %v2484, 0.0
    %v2501 = vmax.f32 %v2485, 0.0
    %v2502 = vmax.f32 %v2486, 0.0
    %v2503 = vmax.f32 %v2487, 0.0
    %v2504 = vmax.f32 %v2488, 0.0
    %v2505 = vmax.f32 %v2489, 0.0
    %v2506 = vmax.f32 %v2490, 0.0
    %v2507 = vmax.f32 %v2491, 0.0
    %v2508 = vmax.f32 %v2492, 0.0
    %v2509 = vmax.f32 %v2493, 0.0
    %v2510 = vmax.f32 %v2494, 0.0
    %v2511 = vmax.f32 %v2495, 0.0
    %v2512 = vmax.f32 %v2496, 0.0
    %v2513 = vmax.f32 %v2497, 0.0
    %v2514 = vmax.f32 %v2498, 0.0
    %v2515 = vmax.f32 %v2499, 0.0
    %2516 = vst.msk [vmem:[#allocation2] sm:$0xff] %vm690, %v2500
    %2517 = vst.msk [vmem:[#allocation2 + $0x8] sm:$0xff] %vm690, %v2501
    %2518 = vst.msk [vmem:[#allocation2 + $0x10] sm:$0xff] %vm690, %v2502
    %2519 = vst.msk [vmem:[#allocation2 + $0x18] sm:$0xff] %vm690, %v2503
    %2520 = vst.msk [vmem:[#allocation2 + $0x20] sm:$0xff] %vm690, %v2504
    %2521 = vst.msk [vmem:[#allocation2 + $0x28] sm:$0xff] %vm690, %v2505
    %2522 = vst.msk [vmem:[#allocation2 + $0x30] sm:$0xff] %vm690, %v2506
    %2523 = vst.msk [vmem:[#allocation2 + $0x38] sm:$0xff] %vm690, %v2507
    %2524 = vst.msk [vmem:[#allocation2 + $0x40] sm:$0xff] %vm690, %v2508
    %2525 = vst.msk [vmem:[#allocation2 + $0x48] sm:$0xff] %vm690, %v2509
    %2526 = vst.msk [vmem:[#allocation2 + $0x50] sm:$0xff] %vm690, %v2510
    %2527 = vst.msk [vmem:[#allocation2 + $0x58] sm:$0xff] %vm690, %v2511
    %2528 = vst.msk [vmem:[#allocation2 + $0x60] sm:$0xff] %vm690, %v2512
    %2529 = vst.msk [vmem:[#allocation2 + $0x68] sm:$0xff] %vm690, %v2513
    %2530 = vst.msk [vmem:[#allocation2 + $0x70] sm:$0xff] %vm690, %v2514
    %2531 = vst.msk [vmem:[#allocation2 + $0x78] sm:$0xff] %vm690, %v2515
    // Predicated region
    $region34: #{residual_block_forward.1} parent=1 // pred_check
      _
    $region35: #{residual_block_forward.1} parent=1 // pred_check_branch
      %2533 = sbr.rel (0) target = $region37
    $region36: #{residual_block_forward.1} parent=1 // pred_region
      %2535 = vsyncadd [#allocation3], 0
      %s2536 = sshll.u32 [#allocation2], 4
      %s2537 = int_to_ptr.vmem [resolvable:$true] %s2536
      %s2538 = sshll.u32 %s8, 4
      %s2539 = int_to_ptr.hbm [resolvable:$true] %s2538
      %2544 = dma.vmem_to_hbm [thread:$0]  %s2537, 2048, %s2539, [#allocation3], 128, 128, 8
    $region37: #{residual_block_forward.1} parent=1 // pred_fallthru
      _
    // Predicated region
    $region38: #{residual_block_forward.1} parent=1 // pred_check
      _
    $region39: #{residual_block_forward.1} parent=1 // pred_check_branch
      %2546 = sbr.rel (0) target = $region41
    $region40: #{residual_block_forward.1} parent=1 // pred_region
      %2548 = dma.done [#allocation3], 2048
    $region41: #{residual_block_forward.1} parent=1 // pred_fallthru
      _
    %2549 = vsyncpa [#allocation3], 1

</llo_original>
